<compile_context>
chip_gen: v7x
topology: tpu7x:2x2x1
jax: 0.10.0
libtpu: 0.0.40
codegen_flags: <defaults>
</compile_context>

<pallas_src>
import functools
import numpy as np

import jax
import jax.numpy as jnp
from jax.experimental import pallas as pl
from jax.experimental.pallas import tpu as pltpu


LANE = 128            # pad all "N" (out-channel / class) dims to the lane width
_NEG_INF = -1e30


def _round_up(x, m):
    return ((x + m - 1) // m) * m


# ---------------------------------------------------------------------------
# Pallas kernels
# ---------------------------------------------------------------------------

def _conv_relu_pool_kernel(pq_ref, w_ref, b_ref, o_ref):
    """Fused valid-conv (matmul over pre-gathered patches) + bias + ReLU + 2x2 pool.

    pq_ref: (4, TM, K) bf16  -- im2col patches, one slab per pooling quadrant
    w_ref : (K, 128)  bf16   -- conv weight flattened to (Cin*KH*KW, Cout_pad)
    b_ref : (1, 128)  f32    -- bias, zero padded to 128 lanes
    o_ref : (TM, 128) bf16   -- pooled activations, lane-dense
    """
    w = w_ref[...]
    a0 = jnp.dot(pq_ref[0], w, preferred_element_type=jnp.float32)
    a1 = jnp.dot(pq_ref[1], w, preferred_element_type=jnp.float32)
    a2 = jnp.dot(pq_ref[2], w, preferred_element_type=jnp.float32)
    a3 = jnp.dot(pq_ref[3], w, preferred_element_type=jnp.float32)
    # bias is quadrant-invariant and ReLU is monotone, so
    #   maxpool(relu(conv + b)) == relu(max_q(conv_q) + b)
    m = jnp.maximum(jnp.maximum(a0, a1), jnp.maximum(a2, a3))
    o_ref[...] = jnp.maximum(m + b_ref[...], 0.0).astype(o_ref.dtype)


def _mlp_softmax_kernel(x_ref, w1_ref, b1_ref, w2_ref, b2_ref, w3_ref, b3_ref,
                        o_ref, *, n_classes):
    """fc1+ReLU -> fc2+ReLU -> fc3 -> softmax, fully fused; weights VMEM resident."""
    h = jnp.dot(x_ref[...], w1_ref[...], preferred_element_type=jnp.float32)
    h = jnp.maximum(h + b1_ref[...], 0.0)
    # dropout_rate = 0.0 in the reference module -> identity (eval semantics)
    h = jnp.dot(h.astype(w2_ref.dtype), w2_ref[...],
                preferred_element_type=jnp.float32)
    h = jnp.maximum(h + b2_ref[...], 0.0)
    logits = jnp.dot(h.astype(w3_ref.dtype), w3_ref[...],
                     preferred_element_type=jnp.float32) + b3_ref[...]
    # mask the zero-padded class lanes so they get exactly zero probability
    col = jax.lax.broadcasted_iota(jnp.int32, logits.shape, 1)
    logits = jnp.where(col < n_classes, logits, _NEG_INF)
    m = jnp.max(logits, axis=-1, keepdims=True)
    e = jnp.exp(logits - m)
    denom = jnp.sum(e, axis=-1, keepdims=True)
    o_ref[...] = (e * pl.reciprocal(denom, approx=False)).astype(o_ref.dtype)


# ---------------------------------------------------------------------------
# Kernel wrappers (tiled grid over rows, "parallel" semantics)
# ---------------------------------------------------------------------------

def conv_relu_pool(patches_q, w_packed, b_packed):
    """patches_q: (4, Mp, K) bf16; w_packed: (K, 128) bf16; b_packed: (1, 128) f32.
    Returns (Mp, 128) bf16 pooled activations, rows ordered (b, ph, pw)."""
    _, Mp, K = patches_q.shape
    TM = LANE if Mp >= LANE else _round_up(Mp, 8)
    Mpad = _round_up(Mp, TM)
    if Mpad != Mp:
        patches_q = jnp.pad(patches_q, ((0, 0), (0, Mpad - Mp), (0, 0)))
    cost = pl.CostEstimate(
        flops=2 * 4 * Mpad * K * LANE,
        transcendentals=0,
        bytes_accessed=int(4 * Mpad * K * 2 + K * LANE * 2 + LANE * 4
                           + Mpad * LANE * 2),
    )
    out = pl.pallas_call(
        _conv_relu_pool_kernel,
        out_shape=jax.ShapeDtypeStruct((Mpad, LANE), jnp.bfloat16),
        grid=(Mpad // TM,),
        in_specs=[
            pl.BlockSpec((4, TM, K), lambda m: (0, m, 0)),
            pl.BlockSpec((K, LANE), lambda m: (0, 0)),
            pl.BlockSpec((1, LANE), lambda m: (0, 0)),
        ],
        out_specs=pl.BlockSpec((TM, LANE), lambda m: (m, 0)),
        compiler_params=pltpu.CompilerParams(
            dimension_semantics=("parallel",),
            vmem_limit_bytes=32 * 1024 * 1024),
        cost_estimate=cost,
    )(patches_q, w_packed, b_packed)
    return out[:Mp]


def mlp_softmax_head(x, fc_params, n_classes=100):
    """x: (B, 400). Returns (B, n_classes) f32 softmax probabilities."""
    B, K1 = x.shape
    TM = LANE if B >= LANE else _round_up(B, 8)
    Mpad = _round_up(B, TM)
    xp = jnp.pad(x, ((0, Mpad - B), (0, 0))).astype(jnp.bfloat16)
    w1, b1, w2, b2, w3, b3 = fc_params
    cost = pl.CostEstimate(
        flops=2 * Mpad * (K1 * LANE + LANE * LANE + LANE * LANE),
        transcendentals=Mpad * LANE,
        bytes_accessed=int(Mpad * K1 * 2 + (K1 + 2 * LANE) * LANE * 2
                           + 3 * LANE * 4 + Mpad * LANE * 4),
    )
    kernel = functools.partial(_mlp_softmax_kernel, n_classes=n_classes)
    out = pl.pallas_call(
        kernel,
        out_shape=jax.ShapeDtypeStruct((Mpad, LANE), jnp.float32),
        grid=(Mpad // TM,),
        in_specs=[
            pl.BlockSpec((TM, K1), lambda m: (m, 0)),
            pl.BlockSpec((K1, LANE), lambda m: (0, 0)),
            pl.BlockSpec((1, LANE), lambda m: (0, 0)),
            pl.BlockSpec((LANE, LANE), lambda m: (0, 0)),
            pl.BlockSpec((1, LANE), lambda m: (0, 0)),
            pl.BlockSpec((LANE, LANE), lambda m: (0, 0)),
            pl.BlockSpec((1, LANE), lambda m: (0, 0)),
        ],
        out_specs=pl.BlockSpec((TM, LANE), lambda m: (m, 0)),
        compiler_params=pltpu.CompilerParams(
            dimension_semantics=("parallel",),
            vmem_limit_bytes=32 * 1024 * 1024),
        cost_estimate=cost,
    )(xp, w1, b1, w2, b2, w3, b3)
    return out[:B, :n_classes]


# ---------------------------------------------------------------------------
# XLA glue: pooling-quadrant im2col patches (feature order (c, kh, kw))
# ---------------------------------------------------------------------------

def _pool_quadrant_patches(x_nhwc, kh, kw):
    """x_nhwc: (B, H, W, C).  Valid conv (stride 1) followed by 2x2/stride-2 pool.
    Returns (patches, (B, Hp, Wp)) with patches shaped (4, B*Hp*Wp, C*kh*kw),
    rows ordered (b, ph, pw); max over axis 0 of (patches @ W) realises the pool."""
    B, H, W, C = x_nhwc.shape
    Ho, Wo = H - kh + 1, W - kw + 1
    Hp, Wp = Ho // 2, Wo // 2
    cols = []
    for i in range(kh):
        for j in range(kw):
            cols.append(x_nhwc[:, i:i + Ho, j:j + Wo, :])        # (B, Ho, Wo, C)
    p = jnp.stack(cols, axis=0).reshape(kh, kw, B, Ho, Wo, C)
    p = p.transpose(2, 3, 4, 5, 0, 1)                            # (B, Ho, Wo, C, kh, kw)
    p = p.reshape(B, Hp, 2, Wp, 2, C * kh * kw)                  # split 2x2 quadrants
    p = p.transpose(2, 4, 0, 1, 3, 5)                            # (2, 2, B, Hp, Wp, K)
    p = p.reshape(4, B * Hp * Wp, C * kh * kw).astype(jnp.bfloat16)
    return p, (B, Hp, Wp)


# ---------------------------------------------------------------------------
# Parameter init (mimics nn.init.orthogonal_) and one-time kernel-layout packing
# ---------------------------------------------------------------------------

def orthogonal_init(key, shape):
    rows = shape[0]
    cols = int(np.prod(shape[1:]))
    n_max, n_min = max(rows, cols), min(rows, cols)
    a = jax.random.normal(key, (n_max, n_min), jnp.float32)
    q, r = jnp.linalg.qr(a)
    q = q * jnp.sign(jnp.diagonal(r))[None, :]
    if rows < cols:
        q = q.T
    return q[:rows, :cols].reshape(shape).astype(jnp.float32)


def uniform_bias(key, fan_in, n):
    bound = 1.0 / np.sqrt(fan_in)
    return jax.random.uniform(key, (n,), jnp.float32, -bound, bound)


def init_params(key, in_channels=3):
    ks = jax.random.split(key, 10)
    return {
        "conv1_w": orthogonal_init(ks[0], (6, in_channels, 5, 5)),
        "conv1_b": uniform_bias(ks[1], in_channels * 25, 6),
        "conv2_w": orthogonal_init(ks[2], (16, 6, 5, 5)),
        "conv2_b": uniform_bias(ks[3], 6 * 25, 16),
        "fc1_w": orthogonal_init(ks[4], (120, 16 * 5 * 5)),
        "fc1_b": uniform_bias(ks[5], 16 * 5 * 5, 120),
        "fc2_w": orthogonal_init(ks[6], (84, 120)),
        "fc2_b": uniform_bias(ks[7], 120, 84),
        "fc3_w": orthogonal_init(ks[8], (100, 84)),
        "fc3_b": uniform_bias(ks[9], 84, 100),
    }


def pack_params(params):
    """Pre-transpose to (K, N), zero pad N to 128 lanes, cast weights to bf16 —
    done once, stored in kernel layout (no per-forward transposes)."""
    def pack_conv(w, b):
        out_c = w.shape[0]
        k = int(np.prod(w.shape[1:]))
        wt = jnp.pad(w.reshape(out_c, k).T, ((0, 0), (0, LANE - out_c)))
        bp = jnp.pad(b, (0, LANE - out_c)).reshape(1, LANE)
        return wt.astype(jnp.bfloat16), bp.astype(jnp.float32)

    def pack_fc(w, b, k_pad):
        n, k = w.shape
        wt = jnp.pad(w.T, ((0, k_pad - k), (0, LANE - n)))
        bp = jnp.pad(b, (0, LANE - n)).reshape(1, LANE)
        return wt.astype(jnp.bfloat16), bp.astype(jnp.float32)

    c1w, c1b = pack_conv(params["conv1_w"], params["conv1_b"])
    c2w, c2b = pack_conv(params["conv2_w"], params["conv2_b"])
    f1w, f1b = pack_fc(params["fc1_w"], params["fc1_b"], 16 * 5 * 5)
    f2w, f2b = pack_fc(params["fc2_w"], params["fc2_b"], LANE)
    f3w, f3b = pack_fc(params["fc3_w"], params["fc3_b"], LANE)
    return {"conv1": (c1w, c1b), "conv2": (c2w, c2b),
            "fc": (f1w, f1b, f2w, f2b, f3w, f3b)}


# ---------------------------------------------------------------------------
# Forward pass (mirrors LeNet_100.forward, eval semantics)
# ---------------------------------------------------------------------------

def lenet100_forward(packed, x):
    # x: (B, 3, 32, 32) NCHW float32 (32x32 is required by the 16*5*5 flatten)
    B = x.shape[0]
    x = jnp.transpose(x, (0, 2, 3, 1))                        # NHWC (B, 32, 32, 3)

    # conv1 (5x5, 3->6) + ReLU + 2x2 maxpool, fused in one kernel
    pq1, (_, H1, W1) = _pool_quadrant_patches(x, 5, 5)        # (4, B*14*14, 75)
    y1 = conv_relu_pool(pq1, *packed["conv1"])                # (B*14*14, 128)
    y1 = y1[:, :6].reshape(B, H1, W1, 6)                      # real channels only

    # conv2 (5x5, 6->16) + ReLU + 2x2 maxpool, fused in one kernel
    pq2, (_, H2, W2) = _pool_quadrant_patches(y1, 5, 5)       # (4, B*5*5, 150)
    y2 = conv_relu_pool(pq2, *packed["conv2"])                # (B*5*5, 128)
    y2 = y2[:, :16].reshape(B, H2, W2, 16)                    # (B, 5, 5, 16) NHWC

    # flatten in PyTorch NCHW order: (B, 16, 5, 5) -> (B, 400)
    feat = jnp.transpose(y2, (0, 3, 1, 2)).reshape(B, 16 * H2 * W2)

    # fc1+ReLU -> fc2+ReLU -> fc3+softmax (dropout_rate=0.0 -> identity), fused
    return mlp_softmax_head(feat, packed["fc"], n_classes=100)


if __name__ == "__main__":
    key = jax.random.PRNGKey(0)
    k_params, k_x = jax.random.split(key)
    params = init_params(k_params, in_channels=3)
    packed = pack_params(params)          # one-time (K, N)+pad+bf16 layout packing
    x = jax.random.normal(k_x, (2, 3, 32, 32), jnp.float32)

    fwd = jax.jit(lenet100_forward)
    out = jax.block_until_ready(fwd(packed, x))

    assert out.shape == (2, 100), out.shape
    assert bool(jnp.all(jnp.isfinite(out)))
    # softmax rows sum to 1
    assert bool(jnp.allclose(jnp.sum(out, axis=1), 1.0, atol=1e-5))
    print("KERNEL_OK")
</pallas_src>

<mosaic_0001>
module attributes {stable_mosaic.version = 11 : i64} {
  func.func @_conv_relu_pool_kernel(%arg0: i32, %arg1: memref<4x128x75xbf16, #tpu.memory_space<vmem>>, %arg2: memref<75x128xbf16, #tpu.memory_space<vmem>>, %arg3: memref<1x128xf32, #tpu.memory_space<vmem>>, %arg4: memref<128x128xbf16, #tpu.memory_space<vmem>>) attributes {dimension_semantics = [#tpu.dimension_semantics<parallel>], iteration_bounds = array<i64: 4>, scalar_prefetch = 0 : i64, scratch_operands = 0 : i64, tpu.core_type = #tpu.core_type<tc>, window_params = [{transform_indices = @transform_0, window_bounds = array<i64: 4, 128, 75>}, {pipeline_mode = #tpu.pipeline_mode<synchronous>, transform_indices = @transform_1, window_bounds = array<i64: 75, 128>}, {pipeline_mode = #tpu.pipeline_mode<synchronous>, transform_indices = @transform_2, window_bounds = array<i64: 1, 128>}, {transform_indices = @transform_3, window_bounds = array<i64: 128, 128>}]} {
    %c0 = arith.constant 0 : index
    %c0_0 = arith.constant 0 : index
    %0 = vector.load %arg2[%c0, %c0_0] : memref<75x128xbf16, #tpu.memory_space<vmem>>, vector<75x128xbf16>
    %c0_1 = arith.constant 0 : index
    %c0_2 = arith.constant 0 : index
    %c0_3 = arith.constant 0 : index
    %1 = vector.load %arg1[%c0_1, %c0_2, %c0_3] : memref<4x128x75xbf16, #tpu.memory_space<vmem>>, vector<1x128x75xbf16>
    %2 = vector.shape_cast %1 : vector<1x128x75xbf16> to vector<128x75xbf16>
    %cst = arith.constant dense<0.000000e+00> : vector<128x128xf32>
    %3 = tpu.matmul %2, %0, %cst {dimension_numbers = #tpu.dot_dimension_numbers<[1], [0], [0], [1], [0, 0, 1, 1], [], []>} : vector<128x75xbf16>, vector<75x128xbf16>, vector<128x128xf32> -> vector<128x128xf32>
    %c1 = arith.constant 1 : index
    %c0_4 = arith.constant 0 : index
    %c0_5 = arith.constant 0 : index
    %4 = vector.load %arg1[%c1, %c0_4, %c0_5] : memref<4x128x75xbf16, #tpu.memory_space<vmem>>, vector<1x128x75xbf16>
    %5 = vector.shape_cast %4 : vector<1x128x75xbf16> to vector<128x75xbf16>
    %cst_6 = arith.constant dense<0.000000e+00> : vector<128x128xf32>
    %6 = tpu.matmul %5, %0, %cst_6 {dimension_numbers = #tpu.dot_dimension_numbers<[1], [0], [0], [1], [0, 0, 1, 1], [], []>} : vector<128x75xbf16>, vector<75x128xbf16>, vector<128x128xf32> -> vector<128x128xf32>
    %c2 = arith.constant 2 : index
    %c0_7 = arith.constant 0 : index
    %c0_8 = arith.constant 0 : index
    %7 = vector.load %arg1[%c2, %c0_7, %c0_8] : memref<4x128x75xbf16, #tpu.memory_space<vmem>>, vector<1x128x75xbf16>
    %8 = vector.shape_cast %7 : vector<1x128x75xbf16> to vector<128x75xbf16>
    %cst_9 = arith.constant dense<0.000000e+00> : vector<128x128xf32>
    %9 = tpu.matmul %8, %0, %cst_9 {dimension_numbers = #tpu.dot_dimension_numbers<[1], [0], [0], [1], [0, 0, 1, 1], [], []>} : vector<128x75xbf16>, vector<75x128xbf16>, vector<128x128xf32> -> vector<128x128xf32>
    %c3 = arith.constant 3 : index
    %c0_10 = arith.constant 0 : index
    %c0_11 = arith.constant 0 : index
    %10 = vector.load %arg1[%c3, %c0_10, %c0_11] : memref<4x128x75xbf16, #tpu.memory_space<vmem>>, vector<1x128x75xbf16>
    %11 = vector.shape_cast %10 : vector<1x128x75xbf16> to vector<128x75xbf16>
    %cst_12 = arith.constant dense<0.000000e+00> : vector<128x128xf32>
    %12 = tpu.matmul %11, %0, %cst_12 {dimension_numbers = #tpu.dot_dimension_numbers<[1], [0], [0], [1], [0, 0, 1, 1], [], []>} : vector<128x75xbf16>, vector<75x128xbf16>, vector<128x128xf32> -> vector<128x128xf32>
    %13 = arith.maximumf %3, %6 : vector<128x128xf32>
    %14 = arith.maximumf %9, %12 : vector<128x128xf32>
    %15 = arith.maximumf %13, %14 : vector<128x128xf32>
    %c0_13 = arith.constant 0 : index
    %c0_14 = arith.constant 0 : index
    %16 = vector.load %arg3[%c0_13, %c0_14] : memref<1x128xf32, #tpu.memory_space<vmem>>, vector<1x128xf32>
    %17 = vector.broadcast %16 : vector<1x128xf32> to vector<128x128xf32>
    %18 = arith.addf %15, %17 : vector<128x128xf32>
    %cst_15 = arith.constant 0.000000e+00 : f32
    %19 = vector.broadcast %cst_15 : f32 to vector<128x128xf32>
    %20 = arith.maximumf %18, %19 : vector<128x128xf32>
    %21 = arith.truncf %20 : vector<128x128xf32> to vector<128x128xbf16>
    %c0_16 = arith.constant 0 : index
    %c0_17 = arith.constant 0 : index
    %22 = vector.load %arg4[%c0_16, %c0_17] : memref<128x128xbf16, #tpu.memory_space<vmem>>, vector<128x128xbf16>
    tpu.vector_store %arg4[%c0_16, %c0_17], %21 {strides = array<i32>} : memref<128x128xbf16, #tpu.memory_space<vmem>>, vector<128x128xbf16>,
    return
  }
  func.func @transform_0(%arg0: i32) -> (i32, i32, i32) {
    %c0_i32 = arith.constant 0 : i32
    %c0_i32_0 = arith.constant 0 : i32
    %c0_i32_1 = arith.constant 0 : i32
    return %c0_i32, %arg0, %c0_i32_0 : i32, i32, i32
  }
  func.func @transform_1(%arg0: i32) -> (i32, i32) {
    %c0_i32 = arith.constant 0 : i32
    %c0_i32_0 = arith.constant 0 : i32
    %c0_i32_1 = arith.constant 0 : i32
    return %c0_i32, %c0_i32_0 : i32, i32
  }
  func.func @transform_2(%arg0: i32) -> (i32, i32) {
    %c0_i32 = arith.constant 0 : i32
    %c0_i32_0 = arith.constant 0 : i32
    %c0_i32_1 = arith.constant 0 : i32
    return %c0_i32, %c0_i32_0 : i32, i32
  }
  func.func @transform_3(%arg0: i32) -> (i32, i32) {
    %c0_i32 = arith.constant 0 : i32
    %c0_i32_0 = arith.constant 0 : i32
    return %arg0, %c0_i32 : i32, i32
  }
}

module attributes {stable_mosaic.version = 11 : i64} {
  func.func @_conv_relu_pool_kernel(%arg0: i32, %arg1: memref<4x56x150xbf16, #tpu.memory_space<vmem>>, %arg2: memref<150x128xbf16, #tpu.memory_space<vmem>>, %arg3: memref<1x128xf32, #tpu.memory_space<vmem>>, %arg4: memref<56x128xbf16, #tpu.memory_space<vmem>>) attributes {dimension_semantics = [#tpu.dimension_semantics<parallel>], iteration_bounds = array<i64: 1>, scalar_prefetch = 0 : i64, scratch_operands = 0 : i64, tpu.core_type = #tpu.core_type<tc>, window_params = [{transform_indices = @transform_0, window_bounds = array<i64: 4, 56, 150>}, {pipeline_mode = #tpu.pipeline_mode<synchronous>, transform_indices = @transform_1, window_bounds = array<i64: 150, 128>}, {pipeline_mode = #tpu.pipeline_mode<synchronous>, transform_indices = @transform_2, window_bounds = array<i64: 1, 128>}, {transform_indices = @transform_3, window_bounds = array<i64: 56, 128>}]} {
    %c0 = arith.constant 0 : index
    %c0_0 = arith.constant 0 : index
    %0 = vector.load %arg2[%c0, %c0_0] : memref<150x128xbf16, #tpu.memory_space<vmem>>, vector<150x128xbf16>
    %c0_1 = arith.constant 0 : index
    %c0_2 = arith.constant 0 : index
    %c0_3 = arith.constant 0 : index
    %1 = vector.load %arg1[%c0_1, %c0_2, %c0_3] : memref<4x56x150xbf16, #tpu.memory_space<vmem>>, vector<1x56x150xbf16>
    %2 = vector.shape_cast %1 : vector<1x56x150xbf16> to vector<56x150xbf16>
    %cst = arith.constant dense<0.000000e+00> : vector<56x128xf32>
    %3 = tpu.matmul %2, %0, %cst {dimension_numbers = #tpu.dot_dimension_numbers<[1], [0], [0], [1], [0, 0, 1, 1], [], []>} : vector<56x150xbf16>, vector<150x128xbf16>, vector<56x128xf32> -> vector<56x128xf32>
    %c1 = arith.constant 1 : index
    %c0_4 = arith.constant 0 : index
    %c0_5 = arith.constant 0 : index
    %4 = vector.load %arg1[%c1, %c0_4, %c0_5] : memref<4x56x150xbf16, #tpu.memory_space<vmem>>, vector<1x56x150xbf16>
    %5 = vector.shape_cast %4 : vector<1x56x150xbf16> to vector<56x150xbf16>
    %cst_6 = arith.constant dense<0.000000e+00> : vector<56x128xf32>
    %6 = tpu.matmul %5, %0, %cst_6 {dimension_numbers = #tpu.dot_dimension_numbers<[1], [0], [0], [1], [0, 0, 1, 1], [], []>} : vector<56x150xbf16>, vector<150x128xbf16>, vector<56x128xf32> -> vector<56x128xf32>
    %c2 = arith.constant 2 : index
    %c0_7 = arith.constant 0 : index
    %c0_8 = arith.constant 0 : index
    %7 = vector.load %arg1[%c2, %c0_7, %c0_8] : memref<4x56x150xbf16, #tpu.memory_space<vmem>>, vector<1x56x150xbf16>
    %8 = vector.shape_cast %7 : vector<1x56x150xbf16> to vector<56x150xbf16>
    %cst_9 = arith.constant dense<0.000000e+00> : vector<56x128xf32>
    %9 = tpu.matmul %8, %0, %cst_9 {dimension_numbers = #tpu.dot_dimension_numbers<[1], [0], [0], [1], [0, 0, 1, 1], [], []>} : vector<56x150xbf16>, vector<150x128xbf16>, vector<56x128xf32> -> vector<56x128xf32>
    %c3 = arith.constant 3 : index
    %c0_10 = arith.constant 0 : index
    %c0_11 = arith.constant 0 : index
    %10 = vector.load %arg1[%c3, %c0_10, %c0_11] : memref<4x56x150xbf16, #tpu.memory_space<vmem>>, vector<1x56x150xbf16>
    %11 = vector.shape_cast %10 : vector<1x56x150xbf16> to vector<56x150xbf16>
    %cst_12 = arith.constant dense<0.000000e+00> : vector<56x128xf32>
    %12 = tpu.matmul %11, %0, %cst_12 {dimension_numbers = #tpu.dot_dimension_numbers<[1], [0], [0], [1], [0, 0, 1, 1], [], []>} : vector<56x150xbf16>, vector<150x128xbf16>, vector<56x128xf32> -> vector<56x128xf32>
    %13 = arith.maximumf %3, %6 : vector<56x128xf32>
    %14 = arith.maximumf %9, %12 : vector<56x128xf32>
    %15 = arith.maximumf %13, %14 : vector<56x128xf32>
    %c0_13 = arith.constant 0 : index
    %c0_14 = arith.constant 0 : index
    %16 = vector.load %arg3[%c0_13, %c0_14] : memref<1x128xf32, #tpu.memory_space<vmem>>, vector<1x128xf32>
    %17 = vector.broadcast %16 : vector<1x128xf32> to vector<56x128xf32>
    %18 = arith.addf %15, %17 : vector<56x128xf32>
    %cst_15 = arith.constant 0.000000e+00 : f32
    %19 = vector.broadcast %cst_15 : f32 to vector<56x128xf32>
    %20 = arith.maximumf %18, %19 : vector<56x128xf32>
    %21 = arith.truncf %20 : vector<56x128xf32> to vector<56x128xbf16>
    %c0_16 = arith.constant 0 : index
    %c0_17 = arith.constant 0 : index
    %22 = vector.load %arg4[%c0_16, %c0_17] : memref<56x128xbf16, #tpu.memory_space<vmem>>, vector<56x128xbf16>
    tpu.vector_store %arg4[%c0_16, %c0_17], %21 {strides = array<i32>} : memref<56x128xbf16, #tpu.memory_space<vmem>>, vector<56x128xbf16>,
    return
  }
  func.func @transform_0(%arg0: i32) -> (i32, i32, i32) {
    %c0_i32 = arith.constant 0 : i32
    %c0_i32_0 = arith.constant 0 : i32
    %c0_i32_1 = arith.constant 0 : i32
    return %c0_i32, %arg0, %c0_i32_0 : i32, i32, i32
  }
  func.func @transform_1(%arg0: i32) -> (i32, i32) {
    %c0_i32 = arith.constant 0 : i32
    %c0_i32_0 = arith.constant 0 : i32
    %c0_i32_1 = arith.constant 0 : i32
    return %c0_i32, %c0_i32_0 : i32, i32
  }
  func.func @transform_2(%arg0: i32) -> (i32, i32) {
    %c0_i32 = arith.constant 0 : i32
    %c0_i32_0 = arith.constant 0 : i32
    %c0_i32_1 = arith.constant 0 : i32
    return %c0_i32, %c0_i32_0 : i32, i32
  }
  func.func @transform_3(%arg0: i32) -> (i32, i32) {
    %c0_i32 = arith.constant 0 : i32
    %c0_i32_0 = arith.constant 0 : i32
    return %arg0, %c0_i32 : i32, i32
  }
}

module attributes {stable_mosaic.version = 11 : i64} {
  func.func @_mlp_softmax_kernel(%arg0: i32, %arg1: memref<8x400xbf16, #tpu.memory_space<vmem>>, %arg2: memref<400x128xbf16, #tpu.memory_space<vmem>>, %arg3: memref<1x128xf32, #tpu.memory_space<vmem>>, %arg4: memref<128x128xbf16, #tpu.memory_space<vmem>>, %arg5: memref<1x128xf32, #tpu.memory_space<vmem>>, %arg6: memref<128x128xbf16, #tpu.memory_space<vmem>>, %arg7: memref<1x128xf32, #tpu.memory_space<vmem>>, %arg8: memref<8x128xf32, #tpu.memory_space<vmem>>) attributes {dimension_semantics = [#tpu.dimension_semantics<parallel>], iteration_bounds = array<i64: 1>, scalar_prefetch = 0 : i64, scratch_operands = 0 : i64, tpu.core_type = #tpu.core_type<tc>, window_params = [{transform_indices = @transform_0, window_bounds = array<i64: 8, 400>}, {pipeline_mode = #tpu.pipeline_mode<synchronous>, transform_indices = @transform_1, window_bounds = array<i64: 400, 128>}, {pipeline_mode = #tpu.pipeline_mode<synchronous>, transform_indices = @transform_2, window_bounds = array<i64: 1, 128>}, {pipeline_mode = #tpu.pipeline_mode<synchronous>, transform_indices = @transform_3, window_bounds = array<i64: 128, 128>}, {pipeline_mode = #tpu.pipeline_mode<synchronous>, transform_indices = @transform_4, window_bounds = array<i64: 1, 128>}, {pipeline_mode = #tpu.pipeline_mode<synchronous>, transform_indices = @transform_5, window_bounds = array<i64: 128, 128>}, {pipeline_mode = #tpu.pipeline_mode<synchronous>, transform_indices = @transform_6, window_bounds = array<i64: 1, 128>}, {transform_indices = @transform_7, window_bounds = array<i64: 8, 128>}]} {
    %c0 = arith.constant 0 : index
    %c0_0 = arith.constant 0 : index
    %0 = vector.load %arg1[%c0, %c0_0] : memref<8x400xbf16, #tpu.memory_space<vmem>>, vector<8x400xbf16>
    %c0_1 = arith.constant 0 : index
    %c0_2 = arith.constant 0 : index
    %1 = vector.load %arg2[%c0_1, %c0_2] : memref<400x128xbf16, #tpu.memory_space<vmem>>, vector<400x128xbf16>
    %cst = arith.constant dense<0.000000e+00> : vector<8x128xf32>
    %2 = tpu.matmul %0, %1, %cst {dimension_numbers = #tpu.dot_dimension_numbers<[1], [0], [0], [1], [0, 0, 1, 1], [], []>} : vector<8x400xbf16>, vector<400x128xbf16>, vector<8x128xf32> -> vector<8x128xf32>
    %c0_3 = arith.constant 0 : index
    %c0_4 = arith.constant 0 : index
    %3 = vector.load %arg3[%c0_3, %c0_4] : memref<1x128xf32, #tpu.memory_space<vmem>>, vector<1x128xf32>
    %4 = vector.broadcast %3 : vector<1x128xf32> to vector<8x128xf32>
    %5 = arith.addf %2, %4 : vector<8x128xf32>
    %cst_5 = arith.constant 0.000000e+00 : f32
    %6 = vector.broadcast %cst_5 : f32 to vector<8x128xf32>
    %7 = arith.maximumf %5, %6 : vector<8x128xf32>
    %8 = arith.truncf %7 : vector<8x128xf32> to vector<8x128xbf16>
    %c0_6 = arith.constant 0 : index
    %c0_7 = arith.constant 0 : index
    %9 = vector.load %arg4[%c0_6, %c0_7] : memref<128x128xbf16, #tpu.memory_space<vmem>>, vector<128x128xbf16>
    %cst_8 = arith.constant dense<0.000000e+00> : vector<8x128xf32>
    %10 = tpu.matmul %8, %9, %cst_8 {dimension_numbers = #tpu.dot_dimension_numbers<[1], [0], [0], [1], [0, 0, 1, 1], [], []>} : vector<8x128xbf16>, vector<128x128xbf16>, vector<8x128xf32> -> vector<8x128xf32>
    %c0_9 = arith.constant 0 : index
    %c0_10 = arith.constant 0 : index
    %11 = vector.load %arg5[%c0_9, %c0_10] : memref<1x128xf32, #tpu.memory_space<vmem>>, vector<1x128xf32>
    %12 = vector.broadcast %11 : vector<1x128xf32> to vector<8x128xf32>
    %13 = arith.addf %10, %12 : vector<8x128xf32>
    %cst_11 = arith.constant 0.000000e+00 : f32
    %14 = vector.broadcast %cst_11 : f32 to vector<8x128xf32>
    %15 = arith.maximumf %13, %14 : vector<8x128xf32>
    %16 = arith.truncf %15 : vector<8x128xf32> to vector<8x128xbf16>
    %c0_12 = arith.constant 0 : index
    %c0_13 = arith.constant 0 : index
    %17 = vector.load %arg6[%c0_12, %c0_13] : memref<128x128xbf16, #tpu.memory_space<vmem>>, vector<128x128xbf16>
    %cst_14 = arith.constant dense<0.000000e+00> : vector<8x128xf32>
    %18 = tpu.matmul %16, %17, %cst_14 {dimension_numbers = #tpu.dot_dimension_numbers<[1], [0], [0], [1], [0, 0, 1, 1], [], []>} : vector<8x128xbf16>, vector<128x128xbf16>, vector<8x128xf32> -> vector<8x128xf32>
    %c0_15 = arith.constant 0 : index
    %c0_16 = arith.constant 0 : index
    %19 = vector.load %arg7[%c0_15, %c0_16] : memref<1x128xf32, #tpu.memory_space<vmem>>, vector<1x128xf32>
    %20 = vector.broadcast %19 : vector<1x128xf32> to vector<8x128xf32>
    %21 = arith.addf %18, %20 : vector<8x128xf32>
    %22 = tpu.iota {dimensions = array<i32: 1>} : vector<8x128xi32>
    %c100_i32 = arith.constant 100 : i32
    %23 = vector.broadcast %c100_i32 : i32 to vector<8x128xi32>
    %24 = arith.cmpi slt, %22, %23 : vector<8x128xi32>
    %cst_17 = arith.constant -1.000000e+30 : f32
    %25 = vector.broadcast %cst_17 : f32 to vector<8x128xf32>
    %26 = arith.select %24, %21, %25 : vector<8x128xi1>, vector<8x128xf32>
    %cst_18 = arith.constant dense<0xFF800000> : vector<8xf32>
    %27 = vector.multi_reduction <maximumf>, %26, %cst_18 [1] : vector<8x128xf32> to vector<8xf32>
    %28 = vector.shape_cast %27 : vector<8xf32> to vector<8x1xf32>
    %29 = vector.broadcast %28 : vector<8x1xf32> to vector<8x128xf32>
    %30 = arith.subf %26, %29 : vector<8x128xf32>
    %31 = math.exp %30 : vector<8x128xf32>
    %cst_19 = arith.constant dense<0.000000e+00> : vector<8xf32>
    %32 = vector.multi_reduction <add>, %31, %cst_19 [1] : vector<8x128xf32> to vector<8xf32>
    %33 = vector.shape_cast %32 : vector<8xf32> to vector<8x1xf32>
    %34 = tpu.reciprocal %33 : vector<8x1xf32> -> vector<8x1xf32>
    %35 = vector.broadcast %34 : vector<8x1xf32> to vector<8x128xf32>
    %36 = arith.mulf %31, %35 : vector<8x128xf32>
    %c0_20 = arith.constant 0 : index
    %c0_21 = arith.constant 0 : index
    %37 = vector.load %arg8[%c0_20, %c0_21] : memref<8x128xf32, #tpu.memory_space<vmem>>, vector<8x128xf32>
    tpu.vector_store %arg8[%c0_20, %c0_21], %36 {strides = array<i32>} : memref<8x128xf32, #tpu.memory_space<vmem>>, vector<8x128xf32>,
    return
  }
  func.func @transform_0(%arg0: i32) -> (i32, i32) {
    %c0_i32 = arith.constant 0 : i32
    %c0_i32_0 = arith.constant 0 : i32
    return %arg0, %c0_i32 : i32, i32
  }
  func.func @transform_1(%arg0: i32) -> (i32, i32) {
    %c0_i32 = arith.constant 0 : i32
    %c0_i32_0 = arith.constant 0 : i32
    %c0_i32_1 = arith.constant 0 : i32
    return %c0_i32, %c0_i32_0 : i32, i32
  }
  func.func @transform_2(%arg0: i32) -> (i32, i32) {
    %c0_i32 = arith.constant 0 : i32
    %c0_i32_0 = arith.constant 0 : i32
    %c0_i32_1 = arith.constant 0 : i32
    return %c0_i32, %c0_i32_0 : i32, i32
  }
  func.func @transform_3(%arg0: i32) -> (i32, i32) {
    %c0_i32 = arith.constant 0 : i32
    %c0_i32_0 = arith.constant 0 : i32
    %c0_i32_1 = arith.constant 0 : i32
    return %c0_i32, %c0_i32_0 : i32, i32
  }
  func.func @transform_4(%arg0: i32) -> (i32, i32) {
    %c0_i32 = arith.constant 0 : i32
    %c0_i32_0 = arith.constant 0 : i32
    %c0_i32_1 = arith.constant 0 : i32
    return %c0_i32, %c0_i32_0 : i32, i32
  }
  func.func @transform_5(%arg0: i32) -> (i32, i32) {
    %c0_i32 = arith.constant 0 : i32
    %c0_i32_0 = arith.constant 0 : i32
    %c0_i32_1 = arith.constant 0 : i32
    return %c0_i32, %c0_i32_0 : i32, i32
  }
  func.func @transform_6(%arg0: i32) -> (i32, i32) {
    %c0_i32 = arith.constant 0 : i32
    %c0_i32_0 = arith.constant 0 : i32
    %c0_i32_1 = arith.constant 0 : i32
    return %c0_i32, %c0_i32_0 : i32, i32
  }
  func.func @transform_7(%arg0: i32) -> (i32, i32) {
    %c0_i32 = arith.constant 0 : i32
    %c0_i32_0 = arith.constant 0 : i32
    return %arg0, %c0_i32 : i32, i32
  }
}

</mosaic_0001>

<llo_original>
// kernel: lenet100_forward.3
$region0: #{lenet100_forward.3}
  #allocation0 [shape = 'u32[]', space=smem, size = 0x4, offset = 0x4, fixed_abs, tag = 'smem constant byte address 0x4 - core index']
  #allocation1 [shape = 'u32[144,128]{1,0:T(1,128)}', space=vmem, size = 0x12000, scoped, tag = 'internal scratch']
  %s0 = inlined_call_operand.vmem [shape: bf16[4,512,75], index: 0, kind: input, shape index: {}]
  %s1 = inlined_call_operand.vmem [shape: bf16[75,128], index: 1, kind: input, shape index: {}]
  %s2 = inlined_call_operand.vmem [shape: f32[1,128], index: 2, kind: input, shape index: {}]
  %s3 = inlined_call_operand.vmem [shape: bf16[512,128], index: 3, kind: output, shape index: {}]
  %s4 = sld [smem:[#allocation0]]
  $region86: #{lenet100_forward.3} parent=0
    _
  %s6 = ssub.s32 1, %s4
  %s7 = scalar_select 0, %s6, %s4
  $region1: #{lenet100_forward.3} parent=0
    #allocation2 [shape = 'u8[262144]{0}', space=vmem, size = 0x40000, scoped, tag = 'input window, operand 0']
    loop: start=0, step=1, limit=6
    $region2: #{lenet100_forward.3} parent=1 // loop_pre_header
      _
    $region3: #{lenet100_forward.3} parent=1 // loop_header
      %s9 = sphi 0, %s13
      %p10 = scmp.ge.s32.totalorder %s9, 6
      %s19 = sphi 0, %s21
      %s22 = sphi 0, %s19
      %s23 = sphi 0, %s22
      %s39 = sphi 0, %s23
      %s43 = sphi 0, %s43
      %s45 = sphi 0, %s43
      %s46 = sphi 0, %s45
      %s60 = sphi 0, %s46
      %s64 = sphi 0, %s64
      %s66 = sphi 0, %s64
      %s67 = sphi 0, %s66
      %s81 = sphi 0, %s67
      %s87 = sphi 0, %s89
      %s90 = sphi 0, %s87
      %s91 = sphi 0, %s90
      %s107 = sphi 0, %s91
    $region4: #{lenet100_forward.3} parent=1 // loop_header_branch
      %12 = sbr.rel (%p10) target = $region8
    $region5: #{lenet100_forward.3} parent=1 // loop_body
      %s14 = ssub.s32 %s9, 1
      %s15 = ssub.s32 %s9, 2
      %s16 = sadd.s32 %s9, 1
      %s17 = ssub.s32 %s9, %s16
      %p18 = scmp.eq.s32.totalorder %s17, 0
      %s20 = sadd.s32 %s19, 1
      %s21 = scalar_select %p18, %s19, %s20
      %p24 = pneg %p18
      %p25 = scmp.eq.s32.totalorder %s9, 3
      %p26 = por %p24, %p25
      %p27 = scmp.ne.s32.totalorder %s19, %s22
      %p28 = scmp.eq.s32.totalorder %s9, 0
      %p29 = por %p27, %p28
      %p30 = scmp.ne.s32.totalorder %s19, %s22
      %p31 = scmp.eq.s32.totalorder %s14, 3
      %p32 = por %p30, %p31
      %p33 = scmp.ne.s32.totalorder %s22, %s23
      %p34 = scmp.eq.s32.totalorder %s14, 0
      %p35 = por %p33, %p34
      %p36 = scmp.ne.s32.totalorder %s22, %s23
      %p37 = scmp.eq.s32.totalorder %s15, 3
      %p38 = por %p36, %p37
      %p40 = scmp.ne.s32.totalorder %s23, %s39
      %p41 = scmp.eq.s32.totalorder %s15, 0
      %p42 = por %p40, %p41
      %s44 = sadd.s32 %s43, 1
      %p47 = scmp.eq.s32.totalorder %s9, 3
      %p48 = scmp.ne.s32.totalorder %s43, %s45
      %p49 = scmp.eq.s32.totalorder %s9, 0
      %p50 = por %p48, %p49
      %p51 = scmp.ne.s32.totalorder %s43, %s45
      %p52 = scmp.eq.s32.totalorder %s14, 3
      %p53 = por %p51, %p52
      %p54 = scmp.ne.s32.totalorder %s45, %s46
      %p55 = scmp.eq.s32.totalorder %s14, 0
      %p56 = por %p54, %p55
      %p57 = scmp.ne.s32.totalorder %s45, %s46
      %p58 = scmp.eq.s32.totalorder %s15, 3
      %p59 = por %p57, %p58
      %p61 = scmp.ne.s32.totalorder %s46, %s60
      %p62 = scmp.eq.s32.totalorder %s15, 0
      %p63 = por %p61, %p62
      %s65 = sadd.s32 %s64, 1
      %p68 = scmp.eq.s32.totalorder %s9, 3
      %p69 = scmp.ne.s32.totalorder %s64, %s66
      %p70 = scmp.eq.s32.totalorder %s9, 0
      %p71 = por %p69, %p70
      %p72 = scmp.ne.s32.totalorder %s64, %s66
      %p73 = scmp.eq.s32.totalorder %s14, 3
      %p74 = por %p72, %p73
      %p75 = scmp.ne.s32.totalorder %s66, %s67
      %p76 = scmp.eq.s32.totalorder %s14, 0
      %p77 = por %p75, %p76
      %p78 = scmp.ne.s32.totalorder %s66, %s67
      %p79 = scmp.eq.s32.totalorder %s15, 3
      %p80 = por %p78, %p79
      %p82 = scmp.ne.s32.totalorder %s67, %s81
      %p83 = scmp.eq.s32.totalorder %s15, 0
      %p84 = por %p82, %p83
      %s85 = ssub.s32 %s9, %s16
      %p86 = scmp.eq.s32.totalorder %s85, 0
      %s88 = sadd.s32 %s87, 1
      %s89 = scalar_select %p86, %s87, %s88
      %p92 = pneg %p86
      %p93 = scmp.eq.s32.totalorder %s9, 3
      %p94 = por %p92, %p93
      %p95 = scmp.ne.s32.totalorder %s87, %s90
      %p96 = scmp.eq.s32.totalorder %s9, 0
      %p97 = por %p95, %p96
      %p98 = scmp.ne.s32.totalorder %s87, %s90
      %p99 = scmp.eq.s32.totalorder %s14, 3
      %p100 = por %p98, %p99
      %p101 = scmp.ne.s32.totalorder %s90, %s91
      %p102 = scmp.eq.s32.totalorder %s14, 0
      %p103 = por %p101, %p102
      %p104 = scmp.ne.s32.totalorder %s90, %s91
      %p105 = scmp.eq.s32.totalorder %s15, 3
      %p106 = por %p104, %p105
      %p108 = scmp.ne.s32.totalorder %s91, %s107
      %p109 = scmp.eq.s32.totalorder %s15, 0
      %p110 = por %p108, %p109
      %p111 = scmp.le.s32.totalorder 1, %s9
      %p112 = scmp.lt.s32.totalorder %s9, 5
      %p113 = pnand %p111, %p112
      %p114 = pneg %p113
      // Predicated region
      $region9: #{lenet100_forward.3} parent=5 // pred_check
        _
      $region10: #{lenet100_forward.3} parent=5 // pred_check_branch
        %116 = sbr.rel (%p113) target = $region12
      $region11: #{lenet100_forward.3} parent=5 // pred_region
        %s117 = ssub.s32 %s9, 1
        // Predicated region
        $region13: #{lenet100_forward.3} parent=11 // pred_check
          %p118 = pneg %p56
        $region14: #{lenet100_forward.3} parent=11 // pred_check_branch
          %120 = sbr.rel (%p118) target = $region16
        $region15: #{lenet100_forward.3} parent=11 // pred_region
          _
        $region16: #{lenet100_forward.3} parent=11 // pred_fallthru
          _
        // Predicated region
        $region17: #{lenet100_forward.3} parent=11 // pred_check
          %p121 = pneg %p77
        $region18: #{lenet100_forward.3} parent=11 // pred_check_branch
          %123 = sbr.rel (%p121) target = $region20
        $region19: #{lenet100_forward.3} parent=11 // pred_region
          _
        $region20: #{lenet100_forward.3} parent=11 // pred_fallthru
          _
      $region12: #{lenet100_forward.3} parent=5 // pred_fallthru
        _
      %p124 = scmp.lt.s32.totalorder %s9, 4
      // Predicated region
      $region21: #{lenet100_forward.3} parent=5 // pred_check
        %p125 = pneg %p124
      $region22: #{lenet100_forward.3} parent=5 // pred_check_branch
        %127 = sbr.rel (%p125) target = $region24
      $region23: #{lenet100_forward.3} parent=5 // pred_region
        // Predicated region
        $region25: #{lenet100_forward.3} parent=23 // pred_check
          %p128 = pneg %p29
        $region26: #{lenet100_forward.3} parent=23 // pred_check_branch
          %130 = sbr.rel (%p128) target = $region28
        $region27: #{lenet100_forward.3} parent=23 // pred_region
          %s131 = sand.u32 %s19, 1
          %s132 = sand.u32 %s19, 1
          %s133 = smul.addr %s132, 256
          %s134 = scalar_lea.vmem [#allocation2], %s133
          %s135 = smul.u32 16, %s9
          %s136 = smul.addr %s135, 4
          %s137 = scalar_lea.vmem %s0, %s136
          // Predicated region
          $region29: #{lenet100_forward.3} parent=27 // pred_check
            _
          $region30: #{lenet100_forward.3} parent=27 // pred_check_branch
            %139 = sbr.rel (0) target = $region32
          $region31: #{lenet100_forward.3} parent=27 // pred_region
            // Predicated region
            $region33: #{lenet100_forward.3} parent=31 // pred_check
              _
            $region34: #{lenet100_forward.3} parent=31 // pred_check_branch
              %141 = sbr.rel target = $region36
            $region35: #{lenet100_forward.3} parent=31 // pred_region
              // Predicated region
              $region48: #{lenet100_forward.3} parent=35 // pred_check
                _
              $region49: #{lenet100_forward.3} parent=35 // pred_check_branch
                %282 = sbr.rel (0) target = $region51
              $region50: #{lenet100_forward.3} parent=35 // pred_region
                loop: start=0, step=1, limit=1
                $region52: #{lenet100_forward.3} parent=50 // loop_pre_header
                  _
                $region53: #{lenet100_forward.3} parent=50 // loop_header
                  %s284 = sphi 0, %s288
                  %p285 = scmp.ge.s32.totalorder %s284, 1
                  %s289 = sphi %s137, %s137
                  %s290 = sphi %s134, %s134
                $region54: #{lenet100_forward.3} parent=50 // loop_header_branch
                  %287 = sbr.rel (%p285) target = $region58
                $region55: #{lenet100_forward.3} parent=50 // loop_body
                  _
                $region56: #{lenet100_forward.3} parent=50 // loop_footer
                  %s288 = sadd.s32 1, %s284
                $region57: #{lenet100_forward.3} parent=50 // loop_footer_branch
                  %283 = sbr.rel target = $region53
                $region58: #{lenet100_forward.3} parent=50 // loop_exit
                  _
                loop: start=0, step=1, limit=1
                $region59: #{lenet100_forward.3} parent=50 // loop_pre_header
                  _
                $region60: #{lenet100_forward.3} parent=50 // loop_header
                  %s293 = sphi 0, %s297
                  %p294 = scmp.ge.s32.totalorder %s293, 1
                  %s298 = sphi %s137, %s137
                  %s299 = sphi %s134, %s134
                $region61: #{lenet100_forward.3} parent=50 // loop_header_branch
                  %296 = sbr.rel (%p294) target = $region65
                $region62: #{lenet100_forward.3} parent=50 // loop_body
                  %v300 = vld [vmem:[%s298] sm:$0xf]
                  %301 = vst [vmem:[%s299] sm:$0xf] %v300
                  %v302 = vld [vmem:[%s298 + $0x4] sm:$0xf]
                  %303 = vst [vmem:[%s299 + $0x4] sm:$0xf] %v302
                  %v304 = vld [vmem:[%s298 + $0x8] sm:$0xf]
                  %305 = vst [vmem:[%s299 + $0x8] sm:$0xf] %v304
                  %v306 = vld [vmem:[%s298 + $0xc] sm:$0xf]
                  %307 = vst [vmem:[%s299 + $0xc] sm:$0xf] %v306
                  %v308 = vld [vmem:[%s298 + $0x10] sm:$0xf]
                  %309 = vst [vmem:[%s299 + $0x10] sm:$0xf] %v308
                  %v310 = vld [vmem:[%s298 + $0x14] sm:$0xf]
                  %311 = vst [vmem:[%s299 + $0x14] sm:$0xf] %v310
                  %v312 = vld [vmem:[%s298 + $0x18] sm:$0xf]
                  %313 = vst [vmem:[%s299 + $0x18] sm:$0xf] %v312
                  %v314 = vld [vmem:[%s298 + $0x1c] sm:$0xf]
                  %315 = vst [vmem:[%s299 + $0x1c] sm:$0xf] %v314
                  %v316 = vld [vmem:[%s298 + $0x20] sm:$0xf]
                  %317 = vst [vmem:[%s299 + $0x20] sm:$0xf] %v316
                  %v318 = vld [vmem:[%s298 + $0x24] sm:$0xf]
                  %319 = vst [vmem:[%s299 + $0x24] sm:$0xf] %v318
                  %v320 = vld [vmem:[%s298 + $0x28] sm:$0xf]
                  %321 = vst [vmem:[%s299 + $0x28] sm:$0xf] %v320
                  %v322 = vld [vmem:[%s298 + $0x2c] sm:$0xf]
                  %323 = vst [vmem:[%s299 + $0x2c] sm:$0xf] %v322
                  %v324 = vld [vmem:[%s298 + $0x30] sm:$0xf]
                  %325 = vst [vmem:[%s299 + $0x30] sm:$0xf] %v324
                  %v326 = vld [vmem:[%s298 + $0x34] sm:$0xf]
                  %327 = vst [vmem:[%s299 + $0x34] sm:$0xf] %v326
                  %v328 = vld [vmem:[%s298 + $0x38] sm:$0xf]
                  %329 = vst [vmem:[%s299 + $0x38] sm:$0xf] %v328
                  %v330 = vld [vmem:[%s298 + $0x3c] sm:$0xf]
                  %331 = vst [vmem:[%s299 + $0x3c] sm:$0xf] %v330
                  %v332 = vld [vmem:[%s298 + $0x100] sm:$0xf]
                  %333 = vst [vmem:[%s299 + $0x40] sm:$0xf] %v332
                  %v334 = vld [vmem:[%s298 + $0x104] sm:$0xf]
                  %335 = vst [vmem:[%s299 + $0x44] sm:$0xf] %v334
                  %v336 = vld [vmem:[%s298 + $0x108] sm:$0xf]
                  %337 = vst [vmem:[%s299 + $0x48] sm:$0xf] %v336
                  %v338 = vld [vmem:[%s298 + $0x10c] sm:$0xf]
                  %339 = vst [vmem:[%s299 + $0x4c] sm:$0xf] %v338
                  %v340 = vld [vmem:[%s298 + $0x110] sm:$0xf]
                  %341 = vst [vmem:[%s299 + $0x50] sm:$0xf] %v340
                  %v342 = vld [vmem:[%s298 + $0x114] sm:$0xf]
                  %343 = vst [vmem:[%s299 + $0x54] sm:$0xf] %v342
                  %v344 = vld [vmem:[%s298 + $0x118] sm:$0xf]
                  %345 = vst [vmem:[%s299 + $0x58] sm:$0xf] %v344
                  %v346 = vld [vmem:[%s298 + $0x11c] sm:$0xf]
                  %347 = vst [vmem:[%s299 + $0x5c] sm:$0xf] %v346
                  %v348 = vld [vmem:[%s298 + $0x120] sm:$0xf]
                  %349 = vst [vmem:[%s299 + $0x60] sm:$0xf] %v348
                  %v350 = vld [vmem:[%s298 + $0x124] sm:$0xf]
                  %351 = vst [vmem:[%s299 + $0x64] sm:$0xf] %v350
                  %v352 = vld [vmem:[%s298 + $0x128] sm:$0xf]
                  %353 = vst [vmem:[%s299 + $0x68] sm:$0xf] %v352
                  %v354 = vld [vmem:[%s298 + $0x12c] sm:$0xf]
                  %355 = vst [vmem:[%s299 + $0x6c] sm:$0xf] %v354
                  %v356 = vld [vmem:[%s298 + $0x130] sm:$0xf]
                  %357 = vst [vmem:[%s299 + $0x70] sm:$0xf] %v356
                  %v358 = vld [vmem:[%s298 + $0x134] sm:$0xf]
                  %359 = vst [vmem:[%s299 + $0x74] sm:$0xf] %v358
                  %v360 = vld [vmem:[%s298 + $0x138] sm:$0xf]
                  %361 = vst [vmem:[%s299 + $0x78] sm:$0xf] %v360
                  %v362 = vld [vmem:[%s298 + $0x13c] sm:$0xf]
                  %363 = vst [vmem:[%s299 + $0x7c] sm:$0xf] %v362
                  %v364 = vld [vmem:[%s298 + $0x200] sm:$0xf]
                  %365 = vst [vmem:[%s299 + $0x80] sm:$0xf] %v364
                  %v366 = vld [vmem:[%s298 + $0x204] sm:$0xf]
                  %367 = vst [vmem:[%s299 + $0x84] sm:$0xf] %v366
                  %v368 = vld [vmem:[%s298 + $0x208] sm:$0xf]
                  %369 = vst [vmem:[%s299 + $0x88] sm:$0xf] %v368
                  %v370 = vld [vmem:[%s298 + $0x20c] sm:$0xf]
                  %371 = vst [vmem:[%s299 + $0x8c] sm:$0xf] %v370
                  %v372 = vld [vmem:[%s298 + $0x210] sm:$0xf]
                  %373 = vst [vmem:[%s299 + $0x90] sm:$0xf] %v372
                  %v374 = vld [vmem:[%s298 + $0x214] sm:$0xf]
                  %375 = vst [vmem:[%s299 + $0x94] sm:$0xf] %v374
                  %v376 = vld [vmem:[%s298 + $0x218] sm:$0xf]
                  %377 = vst [vmem:[%s299 + $0x98] sm:$0xf] %v376
                  %v378 = vld [vmem:[%s298 + $0x21c] sm:$0xf]
                  %379 = vst [vmem:[%s299 + $0x9c] sm:$0xf] %v378
                  %v380 = vld [vmem:[%s298 + $0x220] sm:$0xf]
                  %381 = vst [vmem:[%s299 + $0xa0] sm:$0xf] %v380
                  %v382 = vld [vmem:[%s298 + $0x224] sm:$0xf]
                  %383 = vst [vmem:[%s299 + $0xa4] sm:$0xf] %v382
                  %v384 = vld [vmem:[%s298 + $0x228] sm:$0xf]
                  %385 = vst [vmem:[%s299 + $0xa8] sm:$0xf] %v384
                  %v386 = vld [vmem:[%s298 + $0x22c] sm:$0xf]
                  %387 = vst [vmem:[%s299 + $0xac] sm:$0xf] %v386
                  %v388 = vld [vmem:[%s298 + $0x230] sm:$0xf]
                  %389 = vst [vmem:[%s299 + $0xb0] sm:$0xf] %v388
                  %v390 = vld [vmem:[%s298 + $0x234] sm:$0xf]
                  %391 = vst [vmem:[%s299 + $0xb4] sm:$0xf] %v390
                  %v392 = vld [vmem:[%s298 + $0x238] sm:$0xf]
                  %393 = vst [vmem:[%s299 + $0xb8] sm:$0xf] %v392
                  %v394 = vld [vmem:[%s298 + $0x23c] sm:$0xf]
                  %395 = vst [vmem:[%s299 + $0xbc] sm:$0xf] %v394
                  %v396 = vld [vmem:[%s298 + $0x300] sm:$0xf]
                  %397 = vst [vmem:[%s299 + $0xc0] sm:$0xf] %v396
                  %v398 = vld [vmem:[%s298 + $0x304] sm:$0xf]
                  %399 = vst [vmem:[%s299 + $0xc4] sm:$0xf] %v398
                  %v400 = vld [vmem:[%s298 + $0x308] sm:$0xf]
                  %401 = vst [vmem:[%s299 + $0xc8] sm:$0xf] %v400
                  %v402 = vld [vmem:[%s298 + $0x30c] sm:$0xf]
                  %403 = vst [vmem:[%s299 + $0xcc] sm:$0xf] %v402
                  %v404 = vld [vmem:[%s298 + $0x310] sm:$0xf]
                  %405 = vst [vmem:[%s299 + $0xd0] sm:$0xf] %v404
                  %v406 = vld [vmem:[%s298 + $0x314] sm:$0xf]
                  %407 = vst [vmem:[%s299 + $0xd4] sm:$0xf] %v406
                  %v408 = vld [vmem:[%s298 + $0x318] sm:$0xf]
                  %409 = vst [vmem:[%s299 + $0xd8] sm:$0xf] %v408
                  %v410 = vld [vmem:[%s298 + $0x31c] sm:$0xf]
                  %411 = vst [vmem:[%s299 + $0xdc] sm:$0xf] %v410
                  %v412 = vld [vmem:[%s298 + $0x320] sm:$0xf]
                  %413 = vst [vmem:[%s299 + $0xe0] sm:$0xf] %v412
                  %v414 = vld [vmem:[%s298 + $0x324] sm:$0xf]
                  %415 = vst [vmem:[%s299 + $0xe4] sm:$0xf] %v414
                  %v416 = vld [vmem:[%s298 + $0x328] sm:$0xf]
                  %417 = vst [vmem:[%s299 + $0xe8] sm:$0xf] %v416
                  %v418 = vld [vmem:[%s298 + $0x32c] sm:$0xf]
                  %419 = vst [vmem:[%s299 + $0xec] sm:$0xf] %v418
                  %v420 = vld [vmem:[%s298 + $0x330] sm:$0xf]
                  %421 = vst [vmem:[%s299 + $0xf0] sm:$0xf] %v420
                  %v422 = vld [vmem:[%s298 + $0x334] sm:$0xf]
                  %423 = vst [vmem:[%s299 + $0xf4] sm:$0xf] %v422
                  %v424 = vld [vmem:[%s298 + $0x338] sm:$0xf]
                  %425 = vst [vmem:[%s299 + $0xf8] sm:$0xf] %v424
                  %v426 = vld [vmem:[%s298 + $0x33c] sm:$0xf]
                  %427 = vst [vmem:[%s299 + $0xfc] sm:$0xf] %v426
                $region63: #{lenet100_forward.3} parent=50 // loop_footer
                  %s297 = sadd.s32 1, %s293
                $region64: #{lenet100_forward.3} parent=50 // loop_footer_branch
                  %292 = sbr.rel target = $region60
                $region65: #{lenet100_forward.3} parent=50 // loop_exit
                  _
              $region51: #{lenet100_forward.3} parent=35 // pred_fallthru
                _
            $region36: #{lenet100_forward.3} parent=31 // pred_fallthru
              _
            // Predicated region
            $region37: #{lenet100_forward.3} parent=31 // pred_check
              _
            $region38: #{lenet100_forward.3} parent=31 // pred_check_branch
              %143 = sbr.rel (0) target = $region40
            $region39: #{lenet100_forward.3} parent=31 // pred_region
              loop: start=0, step=1, limit=1
              $region41: #{lenet100_forward.3} parent=39 // loop_pre_header
                _
              $region42: #{lenet100_forward.3} parent=39 // loop_header
                %s146 = sphi 0, %s150
                %p147 = scmp.ge.s32.totalorder %s146, 1
                %s151 = sphi %s137, %s137
                %s152 = sphi %s134, %s134
              $region43: #{lenet100_forward.3} parent=39 // loop_header_branch
                %149 = sbr.rel (%p147) target = $region47
              $region44: #{lenet100_forward.3} parent=39 // loop_body
                %v153 = vld [vmem:[%s151] sm:$0xf]
                %154 = vst [vmem:[%s152] sm:$0xf] %v153
                %v155 = vld [vmem:[%s151 + $0x4] sm:$0xf]
                %156 = vst [vmem:[%s152 + $0x4] sm:$0xf] %v155
                %v157 = vld [vmem:[%s151 + $0x8] sm:$0xf]
                %158 = vst [vmem:[%s152 + $0x8] sm:$0xf] %v157
                %v159 = vld [vmem:[%s151 + $0xc] sm:$0xf]
                %160 = vst [vmem:[%s152 + $0xc] sm:$0xf] %v159
                %v161 = vld [vmem:[%s151 + $0x10] sm:$0xf]
                %162 = vst [vmem:[%s152 + $0x10] sm:$0xf] %v161
                %v163 = vld [vmem:[%s151 + $0x14] sm:$0xf]
                %164 = vst [vmem:[%s152 + $0x14] sm:$0xf] %v163
                %v165 = vld [vmem:[%s151 + $0x18] sm:$0xf]
                %166 = vst [vmem:[%s152 + $0x18] sm:$0xf] %v165
                %v167 = vld [vmem:[%s151 + $0x1c] sm:$0xf]
                %168 = vst [vmem:[%s152 + $0x1c] sm:$0xf] %v167
                %v169 = vld [vmem:[%s151 + $0x20] sm:$0xf]
                %170 = vst [vmem:[%s152 + $0x20] sm:$0xf] %v169
                %v171 = vld [vmem:[%s151 + $0x24] sm:$0xf]
                %172 = vst [vmem:[%s152 + $0x24] sm:$0xf] %v171
                %v173 = vld [vmem:[%s151 + $0x28] sm:$0xf]
                %174 = vst [vmem:[%s152 + $0x28] sm:$0xf] %v173
                %v175 = vld [vmem:[%s151 + $0x2c] sm:$0xf]
                %176 = vst [vmem:[%s152 + $0x2c] sm:$0xf] %v175
                %v177 = vld [vmem:[%s151 + $0x30] sm:$0xf]
                %178 = vst [vmem:[%s152 + $0x30] sm:$0xf] %v177
                %v179 = vld [vmem:[%s151 + $0x34] sm:$0xf]
                %180 = vst [vmem:[%s152 + $0x34] sm:$0xf] %v179
                %v181 = vld [vmem:[%s151 + $0x38] sm:$0xf]
                %182 = vst [vmem:[%s152 + $0x38] sm:$0xf] %v181
                %v183 = vld [vmem:[%s151 + $0x3c] sm:$0xf]
                %184 = vst [vmem:[%s152 + $0x3c] sm:$0xf] %v183
                %v185 = vld [vmem:[%s151 + $0x100] sm:$0xf]
                %186 = vst [vmem:[%s152 + $0x40] sm:$0xf] %v185
                %v187 = vld [vmem:[%s151 + $0x104] sm:$0xf]
                %188 = vst [vmem:[%s152 + $0x44] sm:$0xf] %v187
                %v189 = vld [vmem:[%s151 + $0x108] sm:$0xf]
                %190 = vst [vmem:[%s152 + $0x48] sm:$0xf] %v189
                %v191 = vld [vmem:[%s151 + $0x10c] sm:$0xf]
                %192 = vst [vmem:[%s152 + $0x4c] sm:$0xf] %v191
                %v193 = vld [vmem:[%s151 + $0x110] sm:$0xf]
                %194 = vst [vmem:[%s152 + $0x50] sm:$0xf] %v193
                %v195 = vld [vmem:[%s151 + $0x114] sm:$0xf]
                %196 = vst [vmem:[%s152 + $0x54] sm:$0xf] %v195
                %v197 = vld [vmem:[%s151 + $0x118] sm:$0xf]
                %198 = vst [vmem:[%s152 + $0x58] sm:$0xf] %v197
                %v199 = vld [vmem:[%s151 + $0x11c] sm:$0xf]
                %200 = vst [vmem:[%s152 + $0x5c] sm:$0xf] %v199
                %v201 = vld [vmem:[%s151 + $0x120] sm:$0xf]
                %202 = vst [vmem:[%s152 + $0x60] sm:$0xf] %v201
                %v203 = vld [vmem:[%s151 + $0x124] sm:$0xf]
                %204 = vst [vmem:[%s152 + $0x64] sm:$0xf] %v203
                %v205 = vld [vmem:[%s151 + $0x128] sm:$0xf]
                %206 = vst [vmem:[%s152 + $0x68] sm:$0xf] %v205
                %v207 = vld [vmem:[%s151 + $0x12c] sm:$0xf]
                %208 = vst [vmem:[%s152 + $0x6c] sm:$0xf] %v207
                %v209 = vld [vmem:[%s151 + $0x130] sm:$0xf]
                %210 = vst [vmem:[%s152 + $0x70] sm:$0xf] %v209
                %v211 = vld [vmem:[%s151 + $0x134] sm:$0xf]
                %212 = vst [vmem:[%s152 + $0x74] sm:$0xf] %v211
                %v213 = vld [vmem:[%s151 + $0x138] sm:$0xf]
                %214 = vst [vmem:[%s152 + $0x78] sm:$0xf] %v213
                %v215 = vld [vmem:[%s151 + $0x13c] sm:$0xf]
                %216 = vst [vmem:[%s152 + $0x7c] sm:$0xf] %v215
                %v217 = vld [vmem:[%s151 + $0x200] sm:$0xf]
                %218 = vst [vmem:[%s152 + $0x80] sm:$0xf] %v217
                %v219 = vld [vmem:[%s151 + $0x204] sm:$0xf]
                %220 = vst [vmem:[%s152 + $0x84] sm:$0xf] %v219
                %v221 = vld [vmem:[%s151 + $0x208] sm:$0xf]
                %222 = vst [vmem:[%s152 + $0x88] sm:$0xf] %v221
                %v223 = vld [vmem:[%s151 + $0x20c] sm:$0xf]
                %224 = vst [vmem:[%s152 + $0x8c] sm:$0xf] %v223
                %v225 = vld [vmem:[%s151 + $0x210] sm:$0xf]
                %226 = vst [vmem:[%s152 + $0x90] sm:$0xf] %v225
                %v227 = vld [vmem:[%s151 + $0x214] sm:$0xf]
                %228 = vst [vmem:[%s152 + $0x94] sm:$0xf] %v227
                %v229 = vld [vmem:[%s151 + $0x218] sm:$0xf]
                %230 = vst [vmem:[%s152 + $0x98] sm:$0xf] %v229
                %v231 = vld [vmem:[%s151 + $0x21c] sm:$0xf]
                %232 = vst [vmem:[%s152 + $0x9c] sm:$0xf] %v231
                %v233 = vld [vmem:[%s151 + $0x220] sm:$0xf]
                %234 = vst [vmem:[%s152 + $0xa0] sm:$0xf] %v233
                %v235 = vld [vmem:[%s151 + $0x224] sm:$0xf]
                %236 = vst [vmem:[%s152 + $0xa4] sm:$0xf] %v235
                %v237 = vld [vmem:[%s151 + $0x228] sm:$0xf]
                %238 = vst [vmem:[%s152 + $0xa8] sm:$0xf] %v237
                %v239 = vld [vmem:[%s151 + $0x22c] sm:$0xf]
                %240 = vst [vmem:[%s152 + $0xac] sm:$0xf] %v239
                %v241 = vld [vmem:[%s151 + $0x230] sm:$0xf]
                %242 = vst [vmem:[%s152 + $0xb0] sm:$0xf] %v241
                %v243 = vld [vmem:[%s151 + $0x234] sm:$0xf]
                %244 = vst [vmem:[%s152 + $0xb4] sm:$0xf] %v243
                %v245 = vld [vmem:[%s151 + $0x238] sm:$0xf]
                %246 = vst [vmem:[%s152 + $0xb8] sm:$0xf] %v245
                %v247 = vld [vmem:[%s151 + $0x23c] sm:$0xf]
                %248 = vst [vmem:[%s152 + $0xbc] sm:$0xf] %v247
                %v249 = vld [vmem:[%s151 + $0x300] sm:$0xf]
                %250 = vst [vmem:[%s152 + $0xc0] sm:$0xf] %v249
                %v251 = vld [vmem:[%s151 + $0x304] sm:$0xf]
                %252 = vst [vmem:[%s152 + $0xc4] sm:$0xf] %v251
                %v253 = vld [vmem:[%s151 + $0x308] sm:$0xf]
                %254 = vst [vmem:[%s152 + $0xc8] sm:$0xf] %v253
                %v255 = vld [vmem:[%s151 + $0x30c] sm:$0xf]
                %256 = vst [vmem:[%s152 + $0xcc] sm:$0xf] %v255
                %v257 = vld [vmem:[%s151 + $0x310] sm:$0xf]
                %258 = vst [vmem:[%s152 + $0xd0] sm:$0xf] %v257
                %v259 = vld [vmem:[%s151 + $0x314] sm:$0xf]
                %260 = vst [vmem:[%s152 + $0xd4] sm:$0xf] %v259
                %v261 = vld [vmem:[%s151 + $0x318] sm:$0xf]
                %262 = vst [vmem:[%s152 + $0xd8] sm:$0xf] %v261
                %v263 = vld [vmem:[%s151 + $0x31c] sm:$0xf]
                %264 = vst [vmem:[%s152 + $0xdc] sm:$0xf] %v263
                %v265 = vld [vmem:[%s151 + $0x320] sm:$0xf]
                %266 = vst [vmem:[%s152 + $0xe0] sm:$0xf] %v265
                %v267 = vld [vmem:[%s151 + $0x324] sm:$0xf]
                %268 = vst [vmem:[%s152 + $0xe4] sm:$0xf] %v267
                %v269 = vld [vmem:[%s151 + $0x328] sm:$0xf]
                %270 = vst [vmem:[%s152 + $0xe8] sm:$0xf] %v269
                %v271 = vld [vmem:[%s151 + $0x32c] sm:$0xf]
                %272 = vst [vmem:[%s152 + $0xec] sm:$0xf] %v271
                %v273 = vld [vmem:[%s151 + $0x330] sm:$0xf]
                %274 = vst [vmem:[%s152 + $0xf0] sm:$0xf] %v273
                %v275 = vld [vmem:[%s151 + $0x334] sm:$0xf]
                %276 = vst [vmem:[%s152 + $0xf4] sm:$0xf] %v275
                %v277 = vld [vmem:[%s151 + $0x338] sm:$0xf]
                %278 = vst [vmem:[%s152 + $0xf8] sm:$0xf] %v277
                %v279 = vld [vmem:[%s151 + $0x33c] sm:$0xf]
                %280 = vst [vmem:[%s152 + $0xfc] sm:$0xf] %v279
              $region45: #{lenet100_forward.3} parent=39 // loop_footer
                %s150 = sadd.s32 1, %s146
              $region46: #{lenet100_forward.3} parent=39 // loop_footer_branch
                %145 = sbr.rel target = $region42
              $region47: #{lenet100_forward.3} parent=39 // loop_exit
                _
            $region40: #{lenet100_forward.3} parent=31 // pred_fallthru
              _
          $region32: #{lenet100_forward.3} parent=27 // pred_fallthru
            _
          %428 = vnop
        $region28: #{lenet100_forward.3} parent=23 // pred_fallthru
          _
      $region24: #{lenet100_forward.3} parent=5 // pred_fallthru
        _
      %p429 = scmp.le.s32.totalorder 1, %s9
      %p430 = scmp.lt.s32.totalorder %s9, 5
      %p431 = pnand %p429, %p430
      %p432 = pneg %p431
      // Predicated region
      $region66: #{lenet100_forward.3} parent=5 // pred_check
        _
      $region67: #{lenet100_forward.3} parent=5 // pred_check_branch
        %434 = sbr.rel (%p431) target = $region69
      $region68: #{lenet100_forward.3} parent=5 // pred_region
        %s435 = ssub.s32 %s9, 1
        %s436 = sand.u32 %s22, 1
        %s437 = sand.u32 %s22, 1
        %s438 = smul.addr %s437, 256
        %s439 = scalar_lea.vmem [#allocation2], %s438
        // Predicated region
        $region70: #{lenet100_forward.3} parent=68 // pred_check
          %p440 = pneg %p35
        $region71: #{lenet100_forward.3} parent=68 // pred_check_branch
          %442 = sbr.rel (%p440) target = $region73
        $region72: #{lenet100_forward.3} parent=68 // pred_region
          _
        $region73: #{lenet100_forward.3} parent=68 // pred_fallthru
          _
        %s443 = sand.u32 %s22, 1
        %s444 = sand.u32 %s22, 1
        %s445 = smul.addr %s444, 256
        %s446 = scalar_lea.vmem [#allocation2], %s445
        %p447 = pneg %p35
        %p448 = pneg %p32
        %p449 = pneg %p56
        %p450 = pneg %p53
        %p451 = pneg %p77
        %p452 = pneg %p74
        %p453 = pneg %p103
        %p454 = pneg %p100
        %s455 = smul.u32 16, %s14
        %p456 = scmp.lt.s32.totalorder %s455, 63
        %s457 = scalar_select %p456, %s455, 63
        %s458 = smul.addr %s457, 4
        %s459 = scalar_lea.vmem %s3, %s458
        %s460 = smul.u32 16, %s14
        %s461 = smul.u32 16, %s14
        %p462 = scmp.lt.s32.totalorder %s461, 63
        %s463 = scalar_select %p462, %s461, 63
        %s464 = smul.addr %s463, 4
        %s465 = scalar_lea.vmem %s3, %s464
        %s466 = smul.u32 16, %s14
        %v468 = vld [vmem:[%s1] sm:$0xf]
        %v469 = vld [vmem:[%s1 + $0x4] sm:$0xf]
        %v470 = vld [vmem:[%s1 + $0x8] sm:$0xf]
        %v471 = vld [vmem:[%s1 + $0xc] sm:$0xf]
        %v472 = vld [vmem:[%s1 + $0x10] sm:$0xf]
        %v473 = vld [vmem:[%s1 + $0x14] sm:$0xf]
        %v474 = vld [vmem:[%s1 + $0x18] sm:$0xf]
        %v475 = vld [vmem:[%s1 + $0x1c] sm:$0xf]
        %v476 = vld [vmem:[%s1 + $0x20] sm:$0xf]
        %v477 = vld [vmem:[%s1 + $0x24] sm:$0x3]
        %v478 = vld [vmem:[%s439] sm:$0xf]
        %v479 = vld [vmem:[%s439 + $0x4] sm:$0xf]
        %v480 = vld [vmem:[%s439 + $0x8] sm:$0xf]
        %v481 = vld [vmem:[%s439 + $0xc] sm:$0xf]
        %v482 = vld [vmem:[%s439 + $0x10] sm:$0xf]
        %v483 = vld [vmem:[%s439 + $0x14] sm:$0xf]
        %v484 = vld [vmem:[%s439 + $0x18] sm:$0xf]
        %v485 = vld [vmem:[%s439 + $0x1c] sm:$0xf]
        %v486 = vld [vmem:[%s439 + $0x20] sm:$0xf]
        %v487 = vld [vmem:[%s439 + $0x24] sm:$0xf]
        %v488 = vld [vmem:[%s439 + $0x28] sm:$0xf]
        %v489 = vld [vmem:[%s439 + $0x2c] sm:$0xf]
        %v490 = vld [vmem:[%s439 + $0x30] sm:$0xf]
        %v491 = vld [vmem:[%s439 + $0x34] sm:$0xf]
        %v492 = vld [vmem:[%s439 + $0x38] sm:$0xf]
        %v493 = vld [vmem:[%s439 + $0x3c] sm:$0xf]
        %v510 = vunpack.c.l.b16 %v478
        %v511 = vunpack.c.l.b16 %v479
        %v512 = vunpack.c.l.b16 %v480
        %v513 = vunpack.c.l.b16 %v481
        %v514 = vunpack.c.l.b16 %v482
        %v515 = vunpack.c.l.b16 %v483
        %v516 = vunpack.c.l.b16 %v484
        %v517 = vunpack.c.l.b16 %v485
        %v518 = vunpack.c.l.b16 %v486
        %v519 = vunpack.c.l.b16 %v487
        %v520 = vunpack.c.l.b16 %v488
        %v521 = vunpack.c.l.b16 %v489
        %v522 = vunpack.c.l.b16 %v490
        %v523 = vunpack.c.l.b16 %v491
        %v524 = vunpack.c.l.b16 %v492
        %v525 = vunpack.c.l.b16 %v493
        %v526 = vpack.c.b16 %v511, %v510
        %v527 = vpack.c.b16 %v513, %v512
        %v528 = vpack.c.b16 %v515, %v514
        %v529 = vpack.c.b16 %v517, %v516
        %v530 = vpack.c.b16 %v519, %v518
        %v531 = vpack.c.b16 %v521, %v520
        %v532 = vpack.c.b16 %v523, %v522
        %v533 = vpack.c.b16 %v525, %v524
        %v544 = vunpack.c.l.b16 %v468
        %v545 = vunpack.c.l.b16 %v469
        %v546 = vunpack.c.l.b16 %v470
        %v547 = vunpack.c.l.b16 %v471
        %v548 = vunpack.c.l.b16 %v472
        %v549 = vunpack.c.l.b16 %v473
        %v550 = vunpack.c.l.b16 %v474
        %v551 = vunpack.c.l.b16 %v475
        %v552 = vunpack.c.l.b16 %v476
        %v553 = vunpack.c.l.b16 %v477
        %v554 = vpack.c.b16 %v545, %v544
        %v555 = vpack.c.b16 %v547, %v546
        %v556 = vpack.c.b16 %v549, %v548
        %v557 = vpack.c.b16 %v551, %v550
        %v558 = vpack.c.b16 %v553, %v552
        %vm563 = vcmask 613376
        %v565 = vsel %vm563, %v526, 0
        %v568 = vsel %vm563, %v527, 0
        %v571 = vsel %vm563, %v528, 0
        %v574 = vsel %vm563, %v529, 0
        %v577 = vsel %vm563, %v530, 0
        %v580 = vsel %vm563, %v531, 0
        %v583 = vsel %vm563, %v532, 0
        %v586 = vsel %vm563, %v533, 0
        %vm588 = vcmask 1044480
        %vm589 = vcmask 1045504
        %v590 = vsel %vm588, 4294967295, 65535
        %v591 = vsel %vm589, %v590, 0
        %v593 = vand.u32 %v558, %v591
        %595 = vmatprep.subr.bf16.mxu0 0
        %596 = vmatpush1.bf16.msra.mxu0 %v554
        %597 = vmatprep.subr.bf16.mxu0 0
        %598 = vmatpush1.bf16.msra.mxu0 %v555
        %599 = vmatprep.subr.bf16.mxu0 0
        %600 = vmatpush1.bf16.msra.mxu0 %v556
        %601 = vmatprep.subr.bf16.mxu0 0
        %602 = vmatpush1.bf16.msra.mxu0 %v557
        %603 = vmatprep.subr.bf16.mxu0 0
        %604 = vmatpush1.bf16.msra.mxu0 %v593
        %605 = vmatprep.subr.bf16.mxu0 0
        %606 = vmatpush1.bf16.msra.mxu0 0
        %607 = vmatprep.subr.bf16.mxu0 0
        %608 = vmatpush1.bf16.msra.mxu0 0
        %609 = vmatprep.subr.bf16.mxu0 0
        %610 = vmatpush1.bf16.msra.mxu0 0
        %611 = vmatprep.subr.bf16.mxu0 0
        %612 = vmatpush1.bf16.msra.mxu0 0
        %613 = vmatprep.subr.bf16.mxu0 0
        %614 = vmatpush1.bf16.msra.mxu0 0
        %615 = vmatprep.subr.bf16.mxu0 0
        %616 = vmatpush1.bf16.msra.mxu0 0
        %617 = vmatprep.subr.bf16.mxu0 0
        %618 = vmatpush1.bf16.msra.mxu0 0
        %619 = vmatprep.subr.bf16.mxu0 0
        %620 = vmatpush1.bf16.msra.mxu0 0
        %621 = vmatprep.subr.bf16.mxu0 0
        %622 = vmatpush1.bf16.msra.mxu0 0
        %623 = vmatprep.subr.bf16.mxu0 0
        %624 = vmatpush1.bf16.msra.mxu0 0
        %625 = vmatprep.subr.bf16.mxu0 0
        %626 = vmatpush1.bf16.msra.mxu0 0
        %627 = vmatprep.mubr.bf16.mxu0 0
        %628 = vmatmul.mubr.bf16.gmra.mrb[0].mxu0 %v565
        %v629 = vpop.f32.mrb[0].mxu0
        %v630 = vadd.f32 0.0, %v629
        %v631 = vpop.f32.mrb[0].mxu0
        %v632 = vpop.f32.mrb[0].mxu0
        %v633 = vadd.f32 0.0, %v632
        %v634 = vpop.f32.mrb[0].mxu0
        %635 = vmatprep.mubr.bf16.mxu0 0
        %636 = vmatmul.mubr.bf16.gmra.mrb[0].mxu0 %v568
        %v637 = vpop.f32.mrb[0].mxu0
        %v638 = vadd.f32 0.0, %v637
        %v639 = vpop.f32.mrb[0].mxu0
        %v640 = vpop.f32.mrb[0].mxu0
        %v641 = vadd.f32 0.0, %v640
        %v642 = vpop.f32.mrb[0].mxu0
        %643 = vmatprep.mubr.bf16.mxu0 0
        %644 = vmatmul.mubr.bf16.gmra.mrb[0].mxu0 %v571
        %v645 = vpop.f32.mrb[0].mxu0
        %v646 = vadd.f32 0.0, %v645
        %v647 = vpop.f32.mrb[0].mxu0
        %v648 = vpop.f32.mrb[0].mxu0
        %v649 = vadd.f32 0.0, %v648
        %v650 = vpop.f32.mrb[0].mxu0
        %651 = vmatprep.mubr.bf16.mxu0 0
        %652 = vmatmul.mubr.bf16.gmra.mrb[0].mxu0 %v574
        %v653 = vpop.f32.mrb[0].mxu0
        %v654 = vadd.f32 0.0, %v653
        %v655 = vpop.f32.mrb[0].mxu0
        %v656 = vpop.f32.mrb[0].mxu0
        %v657 = vadd.f32 0.0, %v656
        %v658 = vpop.f32.mrb[0].mxu0
        %659 = vmatprep.mubr.bf16.mxu0 0
        %660 = vmatmul.mubr.bf16.gmra.mrb[0].mxu0 %v577
        %v661 = vpop.f32.mrb[0].mxu0
        %v662 = vadd.f32 0.0, %v661
        %v663 = vpop.f32.mrb[0].mxu0
        %v664 = vpop.f32.mrb[0].mxu0
        %v665 = vadd.f32 0.0, %v664
        %v666 = vpop.f32.mrb[0].mxu0
        %667 = vmatprep.mubr.bf16.mxu0 0
        %668 = vmatmul.mubr.bf16.gmra.mrb[0].mxu0 %v580
        %v669 = vpop.f32.mrb[0].mxu0
        %v670 = vadd.f32 0.0, %v669
        %v671 = vpop.f32.mrb[0].mxu0
        %v672 = vpop.f32.mrb[0].mxu0
        %v673 = vadd.f32 0.0, %v672
        %v674 = vpop.f32.mrb[0].mxu0
        %675 = vmatprep.mubr.bf16.mxu0 0
        %676 = vmatmul.mubr.bf16.gmra.mrb[0].mxu0 %v583
        %v677 = vpop.f32.mrb[0].mxu0
        %v678 = vadd.f32 0.0, %v677
        %v679 = vpop.f32.mrb[0].mxu0
        %v680 = vpop.f32.mrb[0].mxu0
        %v681 = vadd.f32 0.0, %v680
        %v682 = vpop.f32.mrb[0].mxu0
        %683 = vmatprep.mubr.bf16.mxu0 0
        %684 = vmatmul.mubr.bf16.gmra.mrb[0].mxu0 %v586
        %v685 = vpop.f32.mrb[0].mxu0
        %v686 = vadd.f32 0.0, %v685
        %v687 = vpop.f32.mrb[0].mxu0
        %v688 = vpop.f32.mrb[0].mxu0
        %v689 = vadd.f32 0.0, %v688
        %v690 = vpop.f32.mrb[0].mxu0
        %691 = vdwg.mxu0
        %s692 = scalar_lea.vmem %s439, 64 [#allocation2]
        %v693 = vld [vmem:[%s692] sm:$0xf]
        %v694 = vld [vmem:[%s692 + $0x4] sm:$0xf]
        %v695 = vld [vmem:[%s692 + $0x8] sm:$0xf]
        %v696 = vld [vmem:[%s692 + $0xc] sm:$0xf]
        %v697 = vld [vmem:[%s692 + $0x10] sm:$0xf]
        %v698 = vld [vmem:[%s692 + $0x14] sm:$0xf]
        %v699 = vld [vmem:[%s692 + $0x18] sm:$0xf]
        %v700 = vld [vmem:[%s692 + $0x1c] sm:$0xf]
        %v701 = vld [vmem:[%s692 + $0x20] sm:$0xf]
        %v702 = vld [vmem:[%s692 + $0x24] sm:$0xf]
        %v703 = vld [vmem:[%s692 + $0x28] sm:$0xf]
        %v704 = vld [vmem:[%s692 + $0x2c] sm:$0xf]
        %v705 = vld [vmem:[%s692 + $0x30] sm:$0xf]
        %v706 = vld [vmem:[%s692 + $0x34] sm:$0xf]
        %v707 = vld [vmem:[%s692 + $0x38] sm:$0xf]
        %v708 = vld [vmem:[%s692 + $0x3c] sm:$0xf]
        %v725 = vunpack.c.l.b16 %v693
        %v726 = vunpack.c.l.b16 %v694
        %v727 = vunpack.c.l.b16 %v695
        %v728 = vunpack.c.l.b16 %v696
        %v729 = vunpack.c.l.b16 %v697
        %v730 = vunpack.c.l.b16 %v698
        %v731 = vunpack.c.l.b16 %v699
        %v732 = vunpack.c.l.b16 %v700
        %v733 = vunpack.c.l.b16 %v701
        %v734 = vunpack.c.l.b16 %v702
        %v735 = vunpack.c.l.b16 %v703
        %v736 = vunpack.c.l.b16 %v704
        %v737 = vunpack.c.l.b16 %v705
        %v738 = vunpack.c.l.b16 %v706
        %v739 = vunpack.c.l.b16 %v707
        %v740 = vunpack.c.l.b16 %v708
        %v741 = vpack.c.b16 %v726, %v725
        %v742 = vpack.c.b16 %v728, %v727
        %v743 = vpack.c.b16 %v730, %v729
        %v744 = vpack.c.b16 %v732, %v731
        %v745 = vpack.c.b16 %v734, %v733
        %v746 = vpack.c.b16 %v736, %v735
        %v747 = vpack.c.b16 %v738, %v737
        %v748 = vpack.c.b16 %v740, %v739
        %v750 = vsel %vm563, %v741, 0
        %v753 = vsel %vm563, %v742, 0
        %v756 = vsel %vm563, %v743, 0
        %v759 = vsel %vm563, %v744, 0
        %v762 = vsel %vm563, %v745, 0
        %v765 = vsel %vm563, %v746, 0
        %v768 = vsel %vm563, %v747, 0
        %v771 = vsel %vm563, %v748, 0
        %773 = vmatprep.subr.bf16.mxu0 0
        %774 = vmatpush1.bf16.msra.mxu0 %v554
        %775 = vmatprep.subr.bf16.mxu0 0
        %776 = vmatpush1.bf16.msra.mxu0 %v555
        %777 = vmatprep.subr.bf16.mxu0 0
        %778 = vmatpush1.bf16.msra.mxu0 %v556
        %779 = vmatprep.subr.bf16.mxu0 0
        %780 = vmatpush1.bf16.msra.mxu0 %v557
        %781 = vmatprep.subr.bf16.mxu0 0
        %782 = vmatpush1.bf16.msra.mxu0 %v593
        %783 = vmatprep.subr.bf16.mxu0 0
        %784 = vmatpush1.bf16.msra.mxu0 0
        %785 = vmatprep.subr.bf16.mxu0 0
        %786 = vmatpush1.bf16.msra.mxu0 0
        %787 = vmatprep.subr.bf16.mxu0 0
        %788 = vmatpush1.bf16.msra.mxu0 0
        %789 = vmatprep.subr.bf16.mxu0 0
        %790 = vmatpush1.bf16.msra.mxu0 0
        %791 = vmatprep.subr.bf16.mxu0 0
        %792 = vmatpush1.bf16.msra.mxu0 0
        %793 = vmatprep.subr.bf16.mxu0 0
        %794 = vmatpush1.bf16.msra.mxu0 0
        %795 = vmatprep.subr.bf16.mxu0 0
        %796 = vmatpush1.bf16.msra.mxu0 0
        %797 = vmatprep.subr.bf16.mxu0 0
        %798 = vmatpush1.bf16.msra.mxu0 0
        %799 = vmatprep.subr.bf16.mxu0 0
        %800 = vmatpush1.bf16.msra.mxu0 0
        %801 = vmatprep.subr.bf16.mxu0 0
        %802 = vmatpush1.bf16.msra.mxu0 0
        %803 = vmatprep.subr.bf16.mxu0 0
        %804 = vmatpush1.bf16.msra.mxu0 0
        %805 = vmatprep.mubr.bf16.mxu0 0
        %806 = vmatmul.mubr.bf16.gmra.mrb[0].mxu0 %v750
        %v807 = vpop.f32.mrb[0].mxu0
        %v808 = vadd.f32 0.0, %v807
        %v809 = vpop.f32.mrb[0].mxu0
        %v810 = vpop.f32.mrb[0].mxu0
        %v811 = vadd.f32 0.0, %v810
        %v812 = vpop.f32.mrb[0].mxu0
        %813 = vmatprep.mubr.bf16.mxu0 0
        %814 = vmatmul.mubr.bf16.gmra.mrb[0].mxu0 %v753
        %v815 = vpop.f32.mrb[0].mxu0
        %v816 = vadd.f32 0.0, %v815
        %v817 = vpop.f32.mrb[0].mxu0
        %v818 = vpop.f32.mrb[0].mxu0
        %v819 = vadd.f32 0.0, %v818
        %v820 = vpop.f32.mrb[0].mxu0
        %821 = vmatprep.mubr.bf16.mxu0 0
        %822 = vmatmul.mubr.bf16.gmra.mrb[0].mxu0 %v756
        %v823 = vpop.f32.mrb[0].mxu0
        %v824 = vadd.f32 0.0, %v823
        %v825 = vpop.f32.mrb[0].mxu0
        %v826 = vpop.f32.mrb[0].mxu0
        %v827 = vadd.f32 0.0, %v826
        %v828 = vpop.f32.mrb[0].mxu0
        %829 = vmatprep.mubr.bf16.mxu0 0
        %830 = vmatmul.mubr.bf16.gmra.mrb[0].mxu0 %v759
        %v831 = vpop.f32.mrb[0].mxu0
        %v832 = vadd.f32 0.0, %v831
        %v833 = vpop.f32.mrb[0].mxu0
        %v834 = vpop.f32.mrb[0].mxu0
        %v835 = vadd.f32 0.0, %v834
        %v836 = vpop.f32.mrb[0].mxu0
        %837 = vmatprep.mubr.bf16.mxu0 0
        %838 = vmatmul.mubr.bf16.gmra.mrb[0].mxu0 %v762
        %v839 = vpop.f32.mrb[0].mxu0
        %v840 = vadd.f32 0.0, %v839
        %v841 = vpop.f32.mrb[0].mxu0
        %v842 = vpop.f32.mrb[0].mxu0
        %v843 = vadd.f32 0.0, %v842
        %v844 = vpop.f32.mrb[0].mxu0
        %845 = vmatprep.mubr.bf16.mxu0 0
        %846 = vmatmul.mubr.bf16.gmra.mrb[0].mxu0 %v765
        %v847 = vpop.f32.mrb[0].mxu0
        %v848 = vadd.f32 0.0, %v847
        %v849 = vpop.f32.mrb[0].mxu0
        %v850 = vpop.f32.mrb[0].mxu0
        %v851 = vadd.f32 0.0, %v850
        %v852 = vpop.f32.mrb[0].mxu0
        %853 = vmatprep.mubr.bf16.mxu0 0
        %854 = vmatmul.mubr.bf16.gmra.mrb[0].mxu0 %v768
        %v855 = vpop.f32.mrb[0].mxu0
        %v856 = vadd.f32 0.0, %v855
        %v857 = vpop.f32.mrb[0].mxu0
        %v858 = vpop.f32.mrb[0].mxu0
        %v859 = vadd.f32 0.0, %v858
        %v860 = vpop.f32.mrb[0].mxu0
        %861 = vmatprep.mubr.bf16.mxu0 0
        %862 = vmatmul.mubr.bf16.gmra.mrb[0].mxu0 %v771
        %v863 = vpop.f32.mrb[0].mxu0
        %v864 = vadd.f32 0.0, %v863
        %v865 = vpop.f32.mrb[0].mxu0
        %v866 = vpop.f32.mrb[0].mxu0
        %v867 = vadd.f32 0.0, %v866
        %v868 = vpop.f32.mrb[0].mxu0
        %869 = vdwg.mxu0
        %s870 = scalar_lea.vmem %s439, 128 [#allocation2]
        %v871 = vld [vmem:[%s870] sm:$0xf]
        %v872 = vld [vmem:[%s870 + $0x4] sm:$0xf]
        %v873 = vld [vmem:[%s870 + $0x8] sm:$0xf]
        %v874 = vld [vmem:[%s870 + $0xc] sm:$0xf]
        %v875 = vld [vmem:[%s870 + $0x10] sm:$0xf]
        %v876 = vld [vmem:[%s870 + $0x14] sm:$0xf]
        %v877 = vld [vmem:[%s870 + $0x18] sm:$0xf]
        %v878 = vld [vmem:[%s870 + $0x1c] sm:$0xf]
        %v879 = vld [vmem:[%s870 + $0x20] sm:$0xf]
        %v880 = vld [vmem:[%s870 + $0x24] sm:$0xf]
        %v881 = vld [vmem:[%s870 + $0x28] sm:$0xf]
        %v882 = vld [vmem:[%s870 + $0x2c] sm:$0xf]
        %v883 = vld [vmem:[%s870 + $0x30] sm:$0xf]
        %v884 = vld [vmem:[%s870 + $0x34] sm:$0xf]
        %v885 = vld [vmem:[%s870 + $0x38] sm:$0xf]
        %v886 = vld [vmem:[%s870 + $0x3c] sm:$0xf]
        %v903 = vunpack.c.l.b16 %v871
        %v904 = vunpack.c.l.b16 %v872
        %v905 = vunpack.c.l.b16 %v873
        %v906 = vunpack.c.l.b16 %v874
        %v907 = vunpack.c.l.b16 %v875
        %v908 = vunpack.c.l.b16 %v876
        %v909 = vunpack.c.l.b16 %v877
        %v910 = vunpack.c.l.b16 %v878
        %v911 = vunpack.c.l.b16 %v879
        %v912 = vunpack.c.l.b16 %v880
        %v913 = vunpack.c.l.b16 %v881
        %v914 = vunpack.c.l.b16 %v882
        %v915 = vunpack.c.l.b16 %v883
        %v916 = vunpack.c.l.b16 %v884
        %v917 = vunpack.c.l.b16 %v885
        %v918 = vunpack.c.l.b16 %v886
        %v919 = vpack.c.b16 %v904, %v903
        %v920 = vpack.c.b16 %v906, %v905
        %v921 = vpack.c.b16 %v908, %v907
        %v922 = vpack.c.b16 %v910, %v909
        %v923 = vpack.c.b16 %v912, %v911
        %v924 = vpack.c.b16 %v914, %v913
        %v925 = vpack.c.b16 %v916, %v915
        %v926 = vpack.c.b16 %v918, %v917
        %v928 = vsel %vm563, %v919, 0
        %v931 = vsel %vm563, %v920, 0
        %v934 = vsel %vm563, %v921, 0
        %v937 = vsel %vm563, %v922, 0
        %v940 = vsel %vm563, %v923, 0
        %v943 = vsel %vm563, %v924, 0
        %v946 = vsel %vm563, %v925, 0
        %v949 = vsel %vm563, %v926, 0
        %951 = vmatprep.subr.bf16.mxu0 0
        %952 = vmatpush1.bf16.msra.mxu0 %v554
        %953 = vmatprep.subr.bf16.mxu0 0
        %954 = vmatpush1.bf16.msra.mxu0 %v555
        %955 = vmatprep.subr.bf16.mxu0 0
        %956 = vmatpush1.bf16.msra.mxu0 %v556
        %957 = vmatprep.subr.bf16.mxu0 0
        %958 = vmatpush1.bf16.msra.mxu0 %v557
        %959 = vmatprep.subr.bf16.mxu0 0
        %960 = vmatpush1.bf16.msra.mxu0 %v593
        %961 = vmatprep.subr.bf16.mxu0 0
        %962 = vmatpush1.bf16.msra.mxu0 0
        %963 = vmatprep.subr.bf16.mxu0 0
        %964 = vmatpush1.bf16.msra.mxu0 0
        %965 = vmatprep.subr.bf16.mxu0 0
        %966 = vmatpush1.bf16.msra.mxu0 0
        %967 = vmatprep.subr.bf16.mxu0 0
        %968 = vmatpush1.bf16.msra.mxu0 0
        %969 = vmatprep.subr.bf16.mxu0 0
        %970 = vmatpush1.bf16.msra.mxu0 0
        %971 = vmatprep.subr.bf16.mxu0 0
        %972 = vmatpush1.bf16.msra.mxu0 0
        %973 = vmatprep.subr.bf16.mxu0 0
        %974 = vmatpush1.bf16.msra.mxu0 0
        %975 = vmatprep.subr.bf16.mxu0 0
        %976 = vmatpush1.bf16.msra.mxu0 0
        %977 = vmatprep.subr.bf16.mxu0 0
        %978 = vmatpush1.bf16.msra.mxu0 0
        %979 = vmatprep.subr.bf16.mxu0 0
        %980 = vmatpush1.bf16.msra.mxu0 0
        %981 = vmatprep.subr.bf16.mxu0 0
        %982 = vmatpush1.bf16.msra.mxu0 0
        %983 = vmatprep.mubr.bf16.mxu0 0
        %984 = vmatmul.mubr.bf16.gmra.mrb[0].mxu0 %v928
        %v985 = vpop.f32.mrb[0].mxu0
        %v986 = vadd.f32 0.0, %v985
        %v987 = vpop.f32.mrb[0].mxu0
        %v988 = vpop.f32.mrb[0].mxu0
        %v989 = vadd.f32 0.0, %v988
        %v990 = vpop.f32.mrb[0].mxu0
        %991 = vmatprep.mubr.bf16.mxu0 0
        %992 = vmatmul.mubr.bf16.gmra.mrb[0].mxu0 %v931
        %v993 = vpop.f32.mrb[0].mxu0
        %v994 = vadd.f32 0.0, %v993
        %v995 = vpop.f32.mrb[0].mxu0
        %v996 = vpop.f32.mrb[0].mxu0
        %v997 = vadd.f32 0.0, %v996
        %v998 = vpop.f32.mrb[0].mxu0
        %999 = vmatprep.mubr.bf16.mxu0 0
        %1000 = vmatmul.mubr.bf16.gmra.mrb[0].mxu0 %v934
        %v1001 = vpop.f32.mrb[0].mxu0
        %v1002 = vadd.f32 0.0, %v1001
        %v1003 = vpop.f32.mrb[0].mxu0
        %v1004 = vpop.f32.mrb[0].mxu0
        %v1005 = vadd.f32 0.0, %v1004
        %v1006 = vpop.f32.mrb[0].mxu0
        %1007 = vmatprep.mubr.bf16.mxu0 0
        %1008 = vmatmul.mubr.bf16.gmra.mrb[0].mxu0 %v937
        %v1009 = vpop.f32.mrb[0].mxu0
        %v1010 = vadd.f32 0.0, %v1009
        %v1011 = vpop.f32.mrb[0].mxu0
        %v1012 = vpop.f32.mrb[0].mxu0
        %v1013 = vadd.f32 0.0, %v1012
        %v1014 = vpop.f32.mrb[0].mxu0
        %1015 = vmatprep.mubr.bf16.mxu0 0
        %1016 = vmatmul.mubr.bf16.gmra.mrb[0].mxu0 %v940
        %v1017 = vpop.f32.mrb[0].mxu0
        %v1018 = vadd.f32 0.0, %v1017
        %v1019 = vpop.f32.mrb[0].mxu0
        %v1020 = vpop.f32.mrb[0].mxu0
        %v1021 = vadd.f32 0.0, %v1020
        %v1022 = vpop.f32.mrb[0].mxu0
        %1023 = vmatprep.mubr.bf16.mxu0 0
        %1024 = vmatmul.mubr.bf16.gmra.mrb[0].mxu0 %v943
        %v1025 = vpop.f32.mrb[0].mxu0
        %v1026 = vadd.f32 0.0, %v1025
        %v1027 = vpop.f32.mrb[0].mxu0
        %v1028 = vpop.f32.mrb[0].mxu0
        %v1029 = vadd.f32 0.0, %v1028
        %v1030 = vpop.f32.mrb[0].mxu0
        %1031 = vmatprep.mubr.bf16.mxu0 0
        %1032 = vmatmul.mubr.bf16.gmra.mrb[0].mxu0 %v946
        %v1033 = vpop.f32.mrb[0].mxu0
        %v1034 = vadd.f32 0.0, %v1033
        %v1035 = vpop.f32.mrb[0].mxu0
        %v1036 = vpop.f32.mrb[0].mxu0
        %v1037 = vadd.f32 0.0, %v1036
        %v1038 = vpop.f32.mrb[0].mxu0
        %1039 = vmatprep.mubr.bf16.mxu0 0
        %1040 = vmatmul.mubr.bf16.gmra.mrb[0].mxu0 %v949
        %v1041 = vpop.f32.mrb[0].mxu0
        %v1042 = vadd.f32 0.0, %v1041
        %v1043 = vpop.f32.mrb[0].mxu0
        %v1044 = vpop.f32.mrb[0].mxu0
        %v1045 = vadd.f32 0.0, %v1044
        %v1046 = vpop.f32.mrb[0].mxu0
        %1047 = vdwg.mxu0
        %s1048 = scalar_lea.vmem %s439, 192 [#allocation2]
        %v1049 = vld [vmem:[%s1048] sm:$0xf]
        %v1050 = vld [vmem:[%s1048 + $0x4] sm:$0xf]
        %v1051 = vld [vmem:[%s1048 + $0x8] sm:$0xf]
        %v1052 = vld [vmem:[%s1048 + $0xc] sm:$0xf]
        %v1053 = vld [vmem:[%s1048 + $0x10] sm:$0xf]
        %v1054 = vld [vmem:[%s1048 + $0x14] sm:$0xf]
        %v1055 = vld [vmem:[%s1048 + $0x18] sm:$0xf]
        %v1056 = vld [vmem:[%s1048 + $0x1c] sm:$0xf]
        %v1057 = vld [vmem:[%s1048 + $0x20] sm:$0xf]
        %v1058 = vld [vmem:[%s1048 + $0x24] sm:$0xf]
        %v1059 = vld [vmem:[%s1048 + $0x28] sm:$0xf]
        %v1060 = vld [vmem:[%s1048 + $0x2c] sm:$0xf]
        %v1061 = vld [vmem:[%s1048 + $0x30] sm:$0xf]
        %v1062 = vld [vmem:[%s1048 + $0x34] sm:$0xf]
        %v1063 = vld [vmem:[%s1048 + $0x38] sm:$0xf]
        %v1064 = vld [vmem:[%s1048 + $0x3c] sm:$0xf]
        %v1081 = vunpack.c.l.b16 %v1049
        %v1082 = vunpack.c.l.b16 %v1050
        %v1083 = vunpack.c.l.b16 %v1051
        %v1084 = vunpack.c.l.b16 %v1052
        %v1085 = vunpack.c.l.b16 %v1053
        %v1086 = vunpack.c.l.b16 %v1054
        %v1087 = vunpack.c.l.b16 %v1055
        %v1088 = vunpack.c.l.b16 %v1056
        %v1089 = vunpack.c.l.b16 %v1057
        %v1090 = vunpack.c.l.b16 %v1058
        %v1091 = vunpack.c.l.b16 %v1059
        %v1092 = vunpack.c.l.b16 %v1060
        %v1093 = vunpack.c.l.b16 %v1061
        %v1094 = vunpack.c.l.b16 %v1062
        %v1095 = vunpack.c.l.b16 %v1063
        %v1096 = vunpack.c.l.b16 %v1064
        %v1097 = vpack.c.b16 %v1082, %v1081
        %v1098 = vpack.c.b16 %v1084, %v1083
        %v1099 = vpack.c.b16 %v1086, %v1085
        %v1100 = vpack.c.b16 %v1088, %v1087
        %v1101 = vpack.c.b16 %v1090, %v1089
        %v1102 = vpack.c.b16 %v1092, %v1091
        %v1103 = vpack.c.b16 %v1094, %v1093
        %v1104 = vpack.c.b16 %v1096, %v1095
        %v1106 = vsel %vm563, %v1097, 0
        %v1109 = vsel %vm563, %v1098, 0
        %v1112 = vsel %vm563, %v1099, 0
        %v1115 = vsel %vm563, %v1100, 0
        %v1118 = vsel %vm563, %v1101, 0
        %v1121 = vsel %vm563, %v1102, 0
        %v1124 = vsel %vm563, %v1103, 0
        %v1127 = vsel %vm563, %v1104, 0
        %1129 = vmatprep.subr.bf16.mxu0 0
        %1130 = vmatpush1.bf16.msra.mxu0 %v554
        %1131 = vmatprep.subr.bf16.mxu0 0
        %1132 = vmatpush1.bf16.msra.mxu0 %v555
        %1133 = vmatprep.subr.bf16.mxu0 0
        %1134 = vmatpush1.bf16.msra.mxu0 %v556
        %1135 = vmatprep.subr.bf16.mxu0 0
        %1136 = vmatpush1.bf16.msra.mxu0 %v557
        %1137 = vmatprep.subr.bf16.mxu0 0
        %1138 = vmatpush1.bf16.msra.mxu0 %v593
        %1139 = vmatprep.subr.bf16.mxu0 0
        %1140 = vmatpush1.bf16.msra.mxu0 0
        %1141 = vmatprep.subr.bf16.mxu0 0
        %1142 = vmatpush1.bf16.msra.mxu0 0
        %1143 = vmatprep.subr.bf16.mxu0 0
        %1144 = vmatpush1.bf16.msra.mxu0 0
        %1145 = vmatprep.subr.bf16.mxu0 0
        %1146 = vmatpush1.bf16.msra.mxu0 0
        %1147 = vmatprep.subr.bf16.mxu0 0
        %1148 = vmatpush1.bf16.msra.mxu0 0
        %1149 = vmatprep.subr.bf16.mxu0 0
        %1150 = vmatpush1.bf16.msra.mxu0 0
        %1151 = vmatprep.subr.bf16.mxu0 0
        %1152 = vmatpush1.bf16.msra.mxu0 0
        %1153 = vmatprep.subr.bf16.mxu0 0
        %1154 = vmatpush1.bf16.msra.mxu0 0
        %1155 = vmatprep.subr.bf16.mxu0 0
        %1156 = vmatpush1.bf16.msra.mxu0 0
        %1157 = vmatprep.subr.bf16.mxu0 0
        %1158 = vmatpush1.bf16.msra.mxu0 0
        %1159 = vmatprep.subr.bf16.mxu0 0
        %1160 = vmatpush1.bf16.msra.mxu0 0
        %1161 = vmatprep.mubr.bf16.mxu0 0
        %1162 = vmatmul.mubr.bf16.gmra.mrb[0].mxu0 %v1106
        %v1163 = vpop.f32.mrb[0].mxu0
        %v1164 = vadd.f32 0.0, %v1163
        %v1165 = vpop.f32.mrb[0].mxu0
        %v1166 = vpop.f32.mrb[0].mxu0
        %v1167 = vadd.f32 0.0, %v1166
        %v1168 = vpop.f32.mrb[0].mxu0
        %1169 = vmatprep.mubr.bf16.mxu0 0
        %1170 = vmatmul.mubr.bf16.gmra.mrb[0].mxu0 %v1109
        %v1171 = vpop.f32.mrb[0].mxu0
        %v1172 = vadd.f32 0.0, %v1171
        %v1173 = vpop.f32.mrb[0].mxu0
        %v1174 = vpop.f32.mrb[0].mxu0
        %v1175 = vadd.f32 0.0, %v1174
        %v1176 = vpop.f32.mrb[0].mxu0
        %1177 = vmatprep.mubr.bf16.mxu0 0
        %1178 = vmatmul.mubr.bf16.gmra.mrb[0].mxu0 %v1112
        %v1179 = vpop.f32.mrb[0].mxu0
        %v1180 = vadd.f32 0.0, %v1179
        %v1181 = vpop.f32.mrb[0].mxu0
        %v1182 = vpop.f32.mrb[0].mxu0
        %v1183 = vadd.f32 0.0, %v1182
        %v1184 = vpop.f32.mrb[0].mxu0
        %1185 = vmatprep.mubr.bf16.mxu0 0
        %1186 = vmatmul.mubr.bf16.gmra.mrb[0].mxu0 %v1115
        %v1187 = vpop.f32.mrb[0].mxu0
        %v1188 = vadd.f32 0.0, %v1187
        %v1189 = vpop.f32.mrb[0].mxu0
        %v1190 = vpop.f32.mrb[0].mxu0
        %v1191 = vadd.f32 0.0, %v1190
        %v1192 = vpop.f32.mrb[0].mxu0
        %1193 = vmatprep.mubr.bf16.mxu0 0
        %1194 = vmatmul.mubr.bf16.gmra.mrb[0].mxu0 %v1118
        %v1195 = vpop.f32.mrb[0].mxu0
        %v1196 = vadd.f32 0.0, %v1195
        %v1197 = vpop.f32.mrb[0].mxu0
        %v1198 = vpop.f32.mrb[0].mxu0
        %v1199 = vadd.f32 0.0, %v1198
        %v1200 = vpop.f32.mrb[0].mxu0
        %1201 = vmatprep.mubr.bf16.mxu0 0
        %1202 = vmatmul.mubr.bf16.gmra.mrb[0].mxu0 %v1121
        %v1203 = vpop.f32.mrb[0].mxu0
        %v1204 = vadd.f32 0.0, %v1203
        %v1205 = vpop.f32.mrb[0].mxu0
        %v1206 = vpop.f32.mrb[0].mxu0
        %v1207 = vadd.f32 0.0, %v1206
        %v1208 = vpop.f32.mrb[0].mxu0
        %1209 = vmatprep.mubr.bf16.mxu0 0
        %1210 = vmatmul.mubr.bf16.gmra.mrb[0].mxu0 %v1124
        %v1211 = vpop.f32.mrb[0].mxu0
        %v1212 = vadd.f32 0.0, %v1211
        %v1213 = vpop.f32.mrb[0].mxu0
        %v1214 = vpop.f32.mrb[0].mxu0
        %v1215 = vadd.f32 0.0, %v1214
        %v1216 = vpop.f32.mrb[0].mxu0
        %1217 = vmatprep.mubr.bf16.mxu0 0
        %1218 = vmatmul.mubr.bf16.gmra.mrb[0].mxu0 %v1127
        %v1219 = vpop.f32.mrb[0].mxu0
        %v1220 = vadd.f32 0.0, %v1219
        %v1221 = vpop.f32.mrb[0].mxu0
        %v1222 = vpop.f32.mrb[0].mxu0
        %v1223 = vadd.f32 0.0, %v1222
        %v1224 = vpop.f32.mrb[0].mxu0
        %1225 = vdwg.mxu0
        %v1226 = vmax.f32 %v630, %v808
        %v1227 = vmax.f32 %v633, %v811
        %v1228 = vmax.f32 %v638, %v816
        %v1229 = vmax.f32 %v641, %v819
        %v1230 = vmax.f32 %v646, %v824
        %v1231 = vmax.f32 %v649, %v827
        %v1232 = vmax.f32 %v654, %v832
        %v1233 = vmax.f32 %v657, %v835
        %v1234 = vmax.f32 %v662, %v840
        %v1235 = vmax.f32 %v665, %v843
        %v1236 = vmax.f32 %v670, %v848
        %v1237 = vmax.f32 %v673, %v851
        %v1238 = vmax.f32 %v678, %v856
        %v1239 = vmax.f32 %v681, %v859
        %v1240 = vmax.f32 %v686, %v864
        %v1241 = vmax.f32 %v689, %v867
        %v1242 = vmax.f32 %v986, %v1164
        %v1243 = vmax.f32 %v989, %v1167
        %v1244 = vmax.f32 %v994, %v1172
        %v1245 = vmax.f32 %v997, %v1175
        %v1246 = vmax.f32 %v1002, %v1180
        %v1247 = vmax.f32 %v1005, %v1183
        %v1248 = vmax.f32 %v1010, %v1188
        %v1249 = vmax.f32 %v1013, %v1191
        %v1250 = vmax.f32 %v1018, %v1196
        %v1251 = vmax.f32 %v1021, %v1199
        %v1252 = vmax.f32 %v1026, %v1204
        %v1253 = vmax.f32 %v1029, %v1207
        %v1254 = vmax.f32 %v1034, %v1212
        %v1255 = vmax.f32 %v1037, %v1215
        %v1256 = vmax.f32 %v1042, %v1220
        %v1257 = vmax.f32 %v1045, %v1223
        %v1258 = vmax.f32 %v1226, %v1242
        %v1259 = vmax.f32 %v1227, %v1243
        %v1260 = vmax.f32 %v1228, %v1244
        %v1261 = vmax.f32 %v1229, %v1245
        %v1262 = vmax.f32 %v1230, %v1246
        %v1263 = vmax.f32 %v1231, %v1247
        %v1264 = vmax.f32 %v1232, %v1248
        %v1265 = vmax.f32 %v1233, %v1249
        %v1266 = vmax.f32 %v1234, %v1250
        %v1267 = vmax.f32 %v1235, %v1251
        %v1268 = vmax.f32 %v1236, %v1252
        %v1269 = vmax.f32 %v1237, %v1253
        %v1270 = vmax.f32 %v1238, %v1254
        %v1271 = vmax.f32 %v1239, %v1255
        %v1272 = vmax.f32 %v1240, %v1256
        %v1273 = vmax.f32 %v1241, %v1257
        %v1274 = vld [vmem:[%s2] sm:$0x1]
        %v1276 = vlaneseq
        %v1277 = vshrl.u32 %v1276, 7
        %v1278 = vsub.s32 0, %v1277
        %v1279 = vrot.slane %v1274, %v1278
        %v1281 = vadd.f32 %v1258, %v1279
        %v1282 = vadd.f32 %v1259, %v1279
        %v1283 = vadd.f32 %v1260, %v1279
        %v1284 = vadd.f32 %v1261, %v1279
        %v1285 = vadd.f32 %v1262, %v1279
        %v1286 = vadd.f32 %v1263, %v1279
        %v1287 = vadd.f32 %v1264, %v1279
        %v1288 = vadd.f32 %v1265, %v1279
        %v1289 = vadd.f32 %v1266, %v1279
        %v1290 = vadd.f32 %v1267, %v1279
        %v1291 = vadd.f32 %v1268, %v1279
        %v1292 = vadd.f32 %v1269, %v1279
        %v1293 = vadd.f32 %v1270, %v1279
        %v1294 = vadd.f32 %v1271, %v1279
        %v1295 = vadd.f32 %v1272, %v1279
        %v1296 = vadd.f32 %v1273, %v1279
        %v1297 = vmax.f32 %v1281, 0.0
        %v1298 = vmax.f32 %v1282, 0.0
        %v1299 = vmax.f32 %v1283, 0.0
        %v1300 = vmax.f32 %v1284, 0.0
        %v1301 = vmax.f32 %v1285, 0.0
        %v1302 = vmax.f32 %v1286, 0.0
        %v1303 = vmax.f32 %v1287, 0.0
        %v1304 = vmax.f32 %v1288, 0.0
        %v1305 = vmax.f32 %v1289, 0.0
        %v1306 = vmax.f32 %v1290, 0.0
        %v1307 = vmax.f32 %v1291, 0.0
        %v1308 = vmax.f32 %v1292, 0.0
        %v1309 = vmax.f32 %v1293, 0.0
        %v1310 = vmax.f32 %v1294, 0.0
        %v1311 = vmax.f32 %v1295, 0.0
        %v1312 = vmax.f32 %v1296, 0.0
        %v1313 = vpack.c.bf16 %v1298, %v1297
        %v1314 = vpack.c.bf16 %v1300, %v1299
        %v1315 = vpack.c.bf16 %v1302, %v1301
        %v1316 = vpack.c.bf16 %v1304, %v1303
        %v1317 = vpack.c.bf16 %v1306, %v1305
        %v1318 = vpack.c.bf16 %v1308, %v1307
        %v1319 = vpack.c.bf16 %v1310, %v1309
        %v1320 = vpack.c.bf16 %v1312, %v1311
        %v1329 = vunpack.c.l.b16 %v1313
        %v1330 = vunpack.c.h.b16 %v1313
        %v1331 = vunpack.c.l.b16 %v1314
        %v1332 = vunpack.c.h.b16 %v1314
        %v1333 = vunpack.c.l.b16 %v1315
        %v1334 = vunpack.c.h.b16 %v1315
        %v1335 = vunpack.c.l.b16 %v1316
        %v1336 = vunpack.c.h.b16 %v1316
        %v1337 = vunpack.c.l.b16 %v1317
        %v1338 = vunpack.c.h.b16 %v1317
        %v1339 = vunpack.c.l.b16 %v1318
        %v1340 = vunpack.c.h.b16 %v1318
        %v1341 = vunpack.c.l.b16 %v1319
        %v1342 = vunpack.c.h.b16 %v1319
        %v1343 = vunpack.c.l.b16 %v1320
        %v1344 = vunpack.c.h.b16 %v1320
        %v1345 = vpack.c.b16 %v1329, %v1329
        %v1346 = vpack.c.b16 %v1330, %v1330
        %v1347 = vpack.c.b16 %v1331, %v1331
        %v1348 = vpack.c.b16 %v1332, %v1332
        %v1349 = vpack.c.b16 %v1333, %v1333
        %v1350 = vpack.c.b16 %v1334, %v1334
        %v1351 = vpack.c.b16 %v1335, %v1335
        %v1352 = vpack.c.b16 %v1336, %v1336
        %v1353 = vpack.c.b16 %v1337, %v1337
        %v1354 = vpack.c.b16 %v1338, %v1338
        %v1355 = vpack.c.b16 %v1339, %v1339
        %v1356 = vpack.c.b16 %v1340, %v1340
        %v1357 = vpack.c.b16 %v1341, %v1341
        %v1358 = vpack.c.b16 %v1342, %v1342
        %v1359 = vpack.c.b16 %v1343, %v1343
        %v1360 = vpack.c.b16 %v1344, %v1344
        %1377 = vst [vmem:[%s465] sm:$0xf] %v1345
        %1378 = vst [vmem:[%s465 + $0x4] sm:$0xf] %v1346
        %1379 = vst [vmem:[%s465 + $0x8] sm:$0xf] %v1347
        %1380 = vst [vmem:[%s465 + $0xc] sm:$0xf] %v1348
        %1381 = vst [vmem:[%s465 + $0x10] sm:$0xf] %v1349
        %1382 = vst [vmem:[%s465 + $0x14] sm:$0xf] %v1350
        %1383 = vst [vmem:[%s465 + $0x18] sm:$0xf] %v1351
        %1384 = vst [vmem:[%s465 + $0x1c] sm:$0xf] %v1352
        %1385 = vst [vmem:[%s465 + $0x20] sm:$0xf] %v1353
        %1386 = vst [vmem:[%s465 + $0x24] sm:$0xf] %v1354
        %1387 = vst [vmem:[%s465 + $0x28] sm:$0xf] %v1355
        %1388 = vst [vmem:[%s465 + $0x2c] sm:$0xf] %v1356
        %1389 = vst [vmem:[%s465 + $0x30] sm:$0xf] %v1357
        %1390 = vst [vmem:[%s465 + $0x34] sm:$0xf] %v1358
        %1391 = vst [vmem:[%s465 + $0x38] sm:$0xf] %v1359
        %1392 = vst [vmem:[%s465 + $0x3c] sm:$0xf] %v1360
        %s1393 = smul.u32 16, %s14
        %p1394 = scmp.lt.s32.totalorder %s1393, 63
        %s1395 = scalar_select %p1394, %s1393, 63
        %s1396 = smul.addr %s1395, 4
        %s1397 = scalar_lea.vmem %s3, %s1396
        // Predicated region
        $region74: #{lenet100_forward.3} parent=68 // pred_check
          %p1398 = pneg %p100
        $region75: #{lenet100_forward.3} parent=68 // pred_check_branch
          %1400 = sbr.rel (%p1398) target = $region77
        $region76: #{lenet100_forward.3} parent=68 // pred_region
          %s1401 = smul.u32 16, %s14
        $region77: #{lenet100_forward.3} parent=68 // pred_fallthru
          _
      $region69: #{lenet100_forward.3} parent=5 // pred_fallthru
        _
      %p1402 = scmp.le.s32.totalorder 2, %s9
      // Predicated region
      $region78: #{lenet100_forward.3} parent=5 // pred_check
        %p1403 = pneg %p1402
      $region79: #{lenet100_forward.3} parent=5 // pred_check_branch
        %1405 = sbr.rel (%p1403) target = $region81
      $region80: #{lenet100_forward.3} parent=5 // pred_region
        %s1406 = ssub.s32 %s9, 2
        // Predicated region
        $region82: #{lenet100_forward.3} parent=80 // pred_check
          %p1407 = pneg %p106
        $region83: #{lenet100_forward.3} parent=80 // pred_check_branch
          %1409 = sbr.rel (%p1407) target = $region85
        $region84: #{lenet100_forward.3} parent=80 // pred_region
          %s1410 = smul.u32 16, %s15
          %p1411 = scmp.lt.s32.totalorder %s1410, 63
          %s1412 = scalar_select %p1411, %s1410, 63
          %s1413 = smul.addr %s1412, 4
          %s1414 = scalar_lea.vmem %s3, %s1413
        $region85: #{lenet100_forward.3} parent=80 // pred_fallthru
          _
      $region81: #{lenet100_forward.3} parent=5 // pred_fallthru
        _
    $region6: #{lenet100_forward.3} parent=1 // loop_footer
      %s13 = sadd.s32 1, %s9
    $region7: #{lenet100_forward.3} parent=1 // loop_footer_branch
      %8 = sbr.rel target = $region3
    $region8: #{lenet100_forward.3} parent=1 // loop_exit
      _

// kernel: lenet100_forward.4
$region0: #{lenet100_forward.4}
  #allocation0 [shape = 'u32[]', space=smem, size = 0x4, offset = 0x4, fixed_abs, tag = 'smem constant byte address 0x4 - core index']
  #allocation1 [shape = 'u32[144,128]{1,0:T(1,128)}', space=vmem, size = 0x12000, scoped, tag = 'internal scratch']
  %s0 = inlined_call_operand.vmem [shape: bf16[4,56,150], index: 0, kind: input, shape index: {}]
  %s1 = inlined_call_operand.vmem [shape: bf16[150,128], index: 1, kind: input, shape index: {}]
  %s2 = inlined_call_operand.vmem [shape: f32[1,128], index: 2, kind: input, shape index: {}]
  %s3 = inlined_call_operand.vmem [shape: bf16[56,128], index: 3, kind: output, shape index: {}]
  %s4 = sld [smem:[#allocation0]]
  $region22: #{lenet100_forward.4} parent=0
    _
  %s6 = ssub.s32 1, %s4
  %s7 = scalar_select 0, %s6, %s4
  // Predicated region
  $region2: #{lenet100_forward.4} parent=0 // pred_check
    _
  $region3: #{lenet100_forward.4} parent=0 // pred_check_branch
    %9 = sbr.rel (0) target = $region5
  $region4: #{lenet100_forward.4} parent=0 // pred_region
    _
  $region5: #{lenet100_forward.4} parent=0 // pred_fallthru
    _
  // Predicated region
  $region6: #{lenet100_forward.4} parent=0 // pred_check
    _
  $region7: #{lenet100_forward.4} parent=0 // pred_check_branch
    %11 = sbr.rel (0) target = $region9
  $region8: #{lenet100_forward.4} parent=0 // pred_region
    _
  $region9: #{lenet100_forward.4} parent=0 // pred_fallthru
    _
  // Predicated region
  $region10: #{lenet100_forward.4} parent=0 // pred_check
    _
  $region11: #{lenet100_forward.4} parent=0 // pred_check_branch
    %13 = sbr.rel (0) target = $region13
  $region12: #{lenet100_forward.4} parent=0 // pred_region
    _
  $region13: #{lenet100_forward.4} parent=0 // pred_fallthru
    _
  %v15 = vld [vmem:[%s1] sm:$0xf]
  %v16 = vld [vmem:[%s1 + $0x4] sm:$0xf]
  %v17 = vld [vmem:[%s1 + $0x8] sm:$0xf]
  %v18 = vld [vmem:[%s1 + $0xc] sm:$0xf]
  %v19 = vld [vmem:[%s1 + $0x10] sm:$0xf]
  %v20 = vld [vmem:[%s1 + $0x14] sm:$0xf]
  %v21 = vld [vmem:[%s1 + $0x18] sm:$0xf]
  %v22 = vld [vmem:[%s1 + $0x1c] sm:$0xf]
  %v23 = vld [vmem:[%s1 + $0x20] sm:$0xf]
  %v24 = vld [vmem:[%s1 + $0x24] sm:$0xf]
  %v25 = vld [vmem:[%s1 + $0x28] sm:$0xf]
  %v26 = vld [vmem:[%s1 + $0x2c] sm:$0xf]
  %v27 = vld [vmem:[%s1 + $0x30] sm:$0xf]
  %v28 = vld [vmem:[%s1 + $0x34] sm:$0xf]
  %v29 = vld [vmem:[%s1 + $0x38] sm:$0xf]
  %v30 = vld [vmem:[%s1 + $0x3c] sm:$0xf]
  %v31 = vld [vmem:[%s1 + $0x40] sm:$0xf]
  %v32 = vld [vmem:[%s1 + $0x44] sm:$0xf]
  %v33 = vld [vmem:[%s1 + $0x48] sm:$0x7]
  %v34 = vld [vmem:[%s0] sm:$0xff]
  %v35 = vld [vmem:[%s0 + $0x8] sm:$0xff]
  %v36 = vld [vmem:[%s0 + $0x10] sm:$0xff]
  %v37 = vld [vmem:[%s0 + $0x18] sm:$0xff]
  %v38 = vld [vmem:[%s0 + $0x20] sm:$0xff]
  %v39 = vld [vmem:[%s0 + $0x28] sm:$0xff]
  %v40 = vld [vmem:[%s0 + $0x30] sm:$0xff]
  %v48 = vunpack.c.l.b16 %v34
  %v49 = vunpack.c.h.b16 %v34
  %v50 = vunpack.c.l.b16 %v35
  %v51 = vunpack.c.h.b16 %v35
  %v52 = vunpack.c.l.b16 %v36
  %v53 = vunpack.c.h.b16 %v36
  %v54 = vunpack.c.l.b16 %v37
  %v55 = vunpack.c.h.b16 %v37
  %v56 = vunpack.c.l.b16 %v38
  %v57 = vunpack.c.h.b16 %v38
  %v58 = vunpack.c.l.b16 %v39
  %v59 = vunpack.c.h.b16 %v39
  %v60 = vunpack.c.l.b16 %v40
  %v61 = vunpack.c.h.b16 %v40
  %v62 = vpack.c.b16 %v50, %v48
  %v63 = vpack.c.b16 %v51, %v49
  %v64 = vpack.c.b16 %v54, %v52
  %v65 = vpack.c.b16 %v55, %v53
  %v66 = vpack.c.b16 %v58, %v56
  %v67 = vpack.c.b16 %v59, %v57
  %v68 = vpack.c.b16 %v60, %v60
  %v69 = vpack.c.b16 %v61, %v61
  %v93 = vunpack.c.l.b16 %v15
  %v94 = vunpack.c.l.b16 %v16
  %v95 = vunpack.c.l.b16 %v17
  %v96 = vunpack.c.l.b16 %v18
  %v97 = vunpack.c.l.b16 %v19
  %v98 = vunpack.c.l.b16 %v20
  %v99 = vunpack.c.l.b16 %v21
  %v100 = vunpack.c.l.b16 %v22
  %v101 = vunpack.c.l.b16 %v23
  %v102 = vunpack.c.l.b16 %v24
  %v103 = vunpack.c.l.b16 %v25
  %v104 = vunpack.c.l.b16 %v26
  %v105 = vunpack.c.l.b16 %v27
  %v106 = vunpack.c.l.b16 %v28
  %v107 = vunpack.c.l.b16 %v29
  %v108 = vunpack.c.l.b16 %v30
  %v109 = vunpack.c.l.b16 %v31
  %v110 = vunpack.c.l.b16 %v32
  %v111 = vunpack.c.l.b16 %v33
  %v112 = vpack.c.b16 %v94, %v93
  %v113 = vpack.c.b16 %v96, %v95
  %v114 = vpack.c.b16 %v98, %v97
  %v115 = vpack.c.b16 %v100, %v99
  %v116 = vpack.c.b16 %v102, %v101
  %v117 = vpack.c.b16 %v104, %v103
  %v118 = vpack.c.b16 %v106, %v105
  %v119 = vpack.c.b16 %v108, %v107
  %v120 = vpack.c.b16 %v110, %v109
  %v121 = vpack.c.b16 %v111, %v111
  %vm131 = vcmask 179200
  %v133 = vsel %vm131, %v63, 0
  %v136 = vsel %vm131, %v65, 0
  %v139 = vsel %vm131, %v67, 0
  %v142 = vsel %vm131, %v69, 0
  %vm144 = vcmask 1042432
  %v146 = vsel %vm144, %v121, 0
  %148 = vmatprep.subr.bf16.mxu0 0
  %149 = vmatpush1.bf16.msra.mxu0 %v112
  %150 = vmatprep.subr.bf16.mxu0 0
  %151 = vmatpush1.bf16.msra.mxu0 %v113
  %152 = vmatprep.subr.bf16.mxu0 0
  %153 = vmatpush1.bf16.msra.mxu0 %v114
  %154 = vmatprep.subr.bf16.mxu0 0
  %155 = vmatpush1.bf16.msra.mxu0 %v115
  %156 = vmatprep.subr.bf16.mxu0 0
  %157 = vmatpush1.bf16.msra.mxu0 %v116
  %158 = vmatprep.subr.bf16.mxu0 0
  %159 = vmatpush1.bf16.msra.mxu0 %v117
  %160 = vmatprep.subr.bf16.mxu0 0
  %161 = vmatpush1.bf16.msra.mxu0 %v118
  %162 = vmatprep.subr.bf16.mxu0 0
  %163 = vmatpush1.bf16.msra.mxu0 %v119
  %164 = vmatprep.subr.bf16.mxu0 0
  %165 = vmatpush1.bf16.msra.mxu0 %v120
  %166 = vmatprep.subr.bf16.mxu0 0
  %167 = vmatpush1.bf16.msra.mxu0 %v146
  %168 = vmatprep.subr.bf16.mxu0 0
  %169 = vmatpush1.bf16.msra.mxu0 0
  %170 = vmatprep.subr.bf16.mxu0 0
  %171 = vmatpush1.bf16.msra.mxu0 0
  %172 = vmatprep.subr.bf16.mxu0 0
  %173 = vmatpush1.bf16.msra.mxu0 0
  %174 = vmatprep.subr.bf16.mxu0 0
  %175 = vmatpush1.bf16.msra.mxu0 0
  %176 = vmatprep.subr.bf16.mxu0 0
  %177 = vmatpush1.bf16.msra.mxu0 0
  %178 = vmatprep.subr.bf16.mxu0 0
  %179 = vmatpush1.bf16.msra.mxu0 0
  %180 = vmatprep.mubr.bf16.mxu0 %v133
  %181 = vmatmul.mubr.bf16.gmra.mrb[0].mxu0 %v62
  %v182 = vpop.f32.mrb[0].mxu0
  %v183 = vadd.f32 0.0, %v182
  %v184 = vpop.f32.mrb[0].mxu0
  %v185 = vpop.f32.mrb[0].mxu0
  %v186 = vadd.f32 0.0, %v185
  %v187 = vpop.f32.mrb[0].mxu0
  %188 = vmatprep.mubr.bf16.mxu0 %v136
  %189 = vmatmul.mubr.bf16.gmra.mrb[0].mxu0 %v64
  %v190 = vpop.f32.mrb[0].mxu0
  %v191 = vadd.f32 0.0, %v190
  %v192 = vpop.f32.mrb[0].mxu0
  %v193 = vpop.f32.mrb[0].mxu0
  %v194 = vadd.f32 0.0, %v193
  %v195 = vpop.f32.mrb[0].mxu0
  %196 = vmatprep.mubr.bf16.mxu0 %v139
  %197 = vmatmul.mubr.bf16.gmra.mrb[0].mxu0 %v66
  %v198 = vpop.f32.mrb[0].mxu0
  %v199 = vadd.f32 0.0, %v198
  %v200 = vpop.f32.mrb[0].mxu0
  %v201 = vpop.f32.mrb[0].mxu0
  %v202 = vadd.f32 0.0, %v201
  %v203 = vpop.f32.mrb[0].mxu0
  %204 = vmatprep.mubr.bf16.mxu0 %v142
  %205 = vmatmul.mubr.bf16.gmra.mrb[0].mxu0 %v68
  %v206 = vpop.f32.mrb[0].mxu0
  %v207 = vadd.f32 0.0, %v206
  %v208 = vpop.f32.mrb[0].mxu0
  %v209 = vpop.f32.mrb[0].mxu0
  %v210 = vpop.f32.mrb[0].mxu0
  %211 = vdwg.mxu0
  %s212 = scalar_lea.vmem %s0, 56
  %v213 = vld [vmem:[%s212] sm:$0xff]
  %v214 = vld [vmem:[%s212 + $0x8] sm:$0xff]
  %v215 = vld [vmem:[%s212 + $0x10] sm:$0xff]
  %v216 = vld [vmem:[%s212 + $0x18] sm:$0xff]
  %v217 = vld [vmem:[%s212 + $0x20] sm:$0xff]
  %v218 = vld [vmem:[%s212 + $0x28] sm:$0xff]
  %v219 = vld [vmem:[%s212 + $0x30] sm:$0xff]
  %v227 = vunpack.c.l.b16 %v213
  %v228 = vunpack.c.h.b16 %v213
  %v229 = vunpack.c.l.b16 %v214
  %v230 = vunpack.c.h.b16 %v214
  %v231 = vunpack.c.l.b16 %v215
  %v232 = vunpack.c.h.b16 %v215
  %v233 = vunpack.c.l.b16 %v216
  %v234 = vunpack.c.h.b16 %v216
  %v235 = vunpack.c.l.b16 %v217
  %v236 = vunpack.c.h.b16 %v217
  %v237 = vunpack.c.l.b16 %v218
  %v238 = vunpack.c.h.b16 %v218
  %v239 = vunpack.c.l.b16 %v219
  %v240 = vunpack.c.h.b16 %v219
  %v241 = vpack.c.b16 %v229, %v227
  %v242 = vpack.c.b16 %v230, %v228
  %v243 = vpack.c.b16 %v233, %v231
  %v244 = vpack.c.b16 %v234, %v232
  %v245 = vpack.c.b16 %v237, %v235
  %v246 = vpack.c.b16 %v238, %v236
  %v247 = vpack.c.b16 %v239, %v239
  %v248 = vpack.c.b16 %v240, %v240
  %v254 = vsel %vm131, %v242, 0
  %v257 = vsel %vm131, %v244, 0
  %v260 = vsel %vm131, %v246, 0
  %v263 = vsel %vm131, %v248, 0
  %265 = vmatprep.subr.bf16.mxu0 0
  %266 = vmatpush1.bf16.msra.mxu0 %v112
  %267 = vmatprep.subr.bf16.mxu0 0
  %268 = vmatpush1.bf16.msra.mxu0 %v113
  %269 = vmatprep.subr.bf16.mxu0 0
  %270 = vmatpush1.bf16.msra.mxu0 %v114
  %271 = vmatprep.subr.bf16.mxu0 0
  %272 = vmatpush1.bf16.msra.mxu0 %v115
  %273 = vmatprep.subr.bf16.mxu0 0
  %274 = vmatpush1.bf16.msra.mxu0 %v116
  %275 = vmatprep.subr.bf16.mxu0 0
  %276 = vmatpush1.bf16.msra.mxu0 %v117
  %277 = vmatprep.subr.bf16.mxu0 0
  %278 = vmatpush1.bf16.msra.mxu0 %v118
  %279 = vmatprep.subr.bf16.mxu0 0
  %280 = vmatpush1.bf16.msra.mxu0 %v119
  %281 = vmatprep.subr.bf16.mxu0 0
  %282 = vmatpush1.bf16.msra.mxu0 %v120
  %283 = vmatprep.subr.bf16.mxu0 0
  %284 = vmatpush1.bf16.msra.mxu0 %v146
  %285 = vmatprep.subr.bf16.mxu0 0
  %286 = vmatpush1.bf16.msra.mxu0 0
  %287 = vmatprep.subr.bf16.mxu0 0
  %288 = vmatpush1.bf16.msra.mxu0 0
  %289 = vmatprep.subr.bf16.mxu0 0
  %290 = vmatpush1.bf16.msra.mxu0 0
  %291 = vmatprep.subr.bf16.mxu0 0
  %292 = vmatpush1.bf16.msra.mxu0 0
  %293 = vmatprep.subr.bf16.mxu0 0
  %294 = vmatpush1.bf16.msra.mxu0 0
  %295 = vmatprep.subr.bf16.mxu0 0
  %296 = vmatpush1.bf16.msra.mxu0 0
  %297 = vmatprep.mubr.bf16.mxu0 %v254
  %298 = vmatmul.mubr.bf16.gmra.mrb[0].mxu0 %v241
  %v299 = vpop.f32.mrb[0].mxu0
  %v300 = vadd.f32 0.0, %v299
  %v301 = vpop.f32.mrb[0].mxu0
  %v302 = vpop.f32.mrb[0].mxu0
  %v303 = vadd.f32 0.0, %v302
  %v304 = vpop.f32.mrb[0].mxu0
  %305 = vmatprep.mubr.bf16.mxu0 %v257
  %306 = vmatmul.mubr.bf16.gmra.mrb[0].mxu0 %v243
  %v307 = vpop.f32.mrb[0].mxu0
  %v308 = vadd.f32 0.0, %v307
  %v309 = vpop.f32.mrb[0].mxu0
  %v310 = vpop.f32.mrb[0].mxu0
  %v311 = vadd.f32 0.0, %v310
  %v312 = vpop.f32.mrb[0].mxu0
  %313 = vmatprep.mubr.bf16.mxu0 %v260
  %314 = vmatmul.mubr.bf16.gmra.mrb[0].mxu0 %v245
  %v315 = vpop.f32.mrb[0].mxu0
  %v316 = vadd.f32 0.0, %v315
  %v317 = vpop.f32.mrb[0].mxu0
  %v318 = vpop.f32.mrb[0].mxu0
  %v319 = vadd.f32 0.0, %v318
  %v320 = vpop.f32.mrb[0].mxu0
  %321 = vmatprep.mubr.bf16.mxu0 %v263
  %322 = vmatmul.mubr.bf16.gmra.mrb[0].mxu0 %v247
  %v323 = vpop.f32.mrb[0].mxu0
  %v324 = vadd.f32 0.0, %v323
  %v325 = vpop.f32.mrb[0].mxu0
  %v326 = vpop.f32.mrb[0].mxu0
  %v327 = vpop.f32.mrb[0].mxu0
  %328 = vdwg.mxu0
  %s329 = scalar_lea.vmem %s0, 112
  %v330 = vld [vmem:[%s329] sm:$0xff]
  %v331 = vld [vmem:[%s329 + $0x8] sm:$0xff]
  %v332 = vld [vmem:[%s329 + $0x10] sm:$0xff]
  %v333 = vld [vmem:[%s329 + $0x18] sm:$0xff]
  %v334 = vld [vmem:[%s329 + $0x20] sm:$0xff]
  %v335 = vld [vmem:[%s329 + $0x28] sm:$0xff]
  %v336 = vld [vmem:[%s329 + $0x30] sm:$0xff]
  %v344 = vunpack.c.l.b16 %v330
  %v345 = vunpack.c.h.b16 %v330
  %v346 = vunpack.c.l.b16 %v331
  %v347 = vunpack.c.h.b16 %v331
  %v348 = vunpack.c.l.b16 %v332
  %v349 = vunpack.c.h.b16 %v332
  %v350 = vunpack.c.l.b16 %v333
  %v351 = vunpack.c.h.b16 %v333
  %v352 = vunpack.c.l.b16 %v334
  %v353 = vunpack.c.h.b16 %v334
  %v354 = vunpack.c.l.b16 %v335
  %v355 = vunpack.c.h.b16 %v335
  %v356 = vunpack.c.l.b16 %v336
  %v357 = vunpack.c.h.b16 %v336
  %v358 = vpack.c.b16 %v346, %v344
  %v359 = vpack.c.b16 %v347, %v345
  %v360 = vpack.c.b16 %v350, %v348
  %v361 = vpack.c.b16 %v351, %v349
  %v362 = vpack.c.b16 %v354, %v352
  %v363 = vpack.c.b16 %v355, %v353
  %v364 = vpack.c.b16 %v356, %v356
  %v365 = vpack.c.b16 %v357, %v357
  %v371 = vsel %vm131, %v359, 0
  %v374 = vsel %vm131, %v361, 0
  %v377 = vsel %vm131, %v363, 0
  %v380 = vsel %vm131, %v365, 0
  %382 = vmatprep.subr.bf16.mxu0 0
  %383 = vmatpush1.bf16.msra.mxu0 %v112
  %384 = vmatprep.subr.bf16.mxu0 0
  %385 = vmatpush1.bf16.msra.mxu0 %v113
  %386 = vmatprep.subr.bf16.mxu0 0
  %387 = vmatpush1.bf16.msra.mxu0 %v114
  %388 = vmatprep.subr.bf16.mxu0 0
  %389 = vmatpush1.bf16.msra.mxu0 %v115
  %390 = vmatprep.subr.bf16.mxu0 0
  %391 = vmatpush1.bf16.msra.mxu0 %v116
  %392 = vmatprep.subr.bf16.mxu0 0
  %393 = vmatpush1.bf16.msra.mxu0 %v117
  %394 = vmatprep.subr.bf16.mxu0 0
  %395 = vmatpush1.bf16.msra.mxu0 %v118
  %396 = vmatprep.subr.bf16.mxu0 0
  %397 = vmatpush1.bf16.msra.mxu0 %v119
  %398 = vmatprep.subr.bf16.mxu0 0
  %399 = vmatpush1.bf16.msra.mxu0 %v120
  %400 = vmatprep.subr.bf16.mxu0 0
  %401 = vmatpush1.bf16.msra.mxu0 %v146
  %402 = vmatprep.subr.bf16.mxu0 0
  %403 = vmatpush1.bf16.msra.mxu0 0
  %404 = vmatprep.subr.bf16.mxu0 0
  %405 = vmatpush1.bf16.msra.mxu0 0
  %406 = vmatprep.subr.bf16.mxu0 0
  %407 = vmatpush1.bf16.msra.mxu0 0
  %408 = vmatprep.subr.bf16.mxu0 0
  %409 = vmatpush1.bf16.msra.mxu0 0
  %410 = vmatprep.subr.bf16.mxu0 0
  %411 = vmatpush1.bf16.msra.mxu0 0
  %412 = vmatprep.subr.bf16.mxu0 0
  %413 = vmatpush1.bf16.msra.mxu0 0
  %414 = vmatprep.mubr.bf16.mxu0 %v371
  %415 = vmatmul.mubr.bf16.gmra.mrb[0].mxu0 %v358
  %v416 = vpop.f32.mrb[0].mxu0
  %v417 = vadd.f32 0.0, %v416
  %v418 = vpop.f32.mrb[0].mxu0
  %v419 = vpop.f32.mrb[0].mxu0
  %v420 = vadd.f32 0.0, %v419
  %v421 = vpop.f32.mrb[0].mxu0
  %422 = vmatprep.mubr.bf16.mxu0 %v374
  %423 = vmatmul.mubr.bf16.gmra.mrb[0].mxu0 %v360
  %v424 = vpop.f32.mrb[0].mxu0
  %v425 = vadd.f32 0.0, %v424
  %v426 = vpop.f32.mrb[0].mxu0
  %v427 = vpop.f32.mrb[0].mxu0
  %v428 = vadd.f32 0.0, %v427
  %v429 = vpop.f32.mrb[0].mxu0
  %430 = vmatprep.mubr.bf16.mxu0 %v377
  %431 = vmatmul.mubr.bf16.gmra.mrb[0].mxu0 %v362
  %v432 = vpop.f32.mrb[0].mxu0
  %v433 = vadd.f32 0.0, %v432
  %v434 = vpop.f32.mrb[0].mxu0
  %v435 = vpop.f32.mrb[0].mxu0
  %v436 = vadd.f32 0.0, %v435
  %v437 = vpop.f32.mrb[0].mxu0
  %438 = vmatprep.mubr.bf16.mxu0 %v380
  %439 = vmatmul.mubr.bf16.gmra.mrb[0].mxu0 %v364
  %v440 = vpop.f32.mrb[0].mxu0
  %v441 = vadd.f32 0.0, %v440
  %v442 = vpop.f32.mrb[0].mxu0
  %v443 = vpop.f32.mrb[0].mxu0
  %v444 = vpop.f32.mrb[0].mxu0
  %445 = vdwg.mxu0
  %s446 = scalar_lea.vmem %s0, 168
  %v447 = vld [vmem:[%s446] sm:$0xff]
  %v448 = vld [vmem:[%s446 + $0x8] sm:$0xff]
  %v449 = vld [vmem:[%s446 + $0x10] sm:$0xff]
  %v450 = vld [vmem:[%s446 + $0x18] sm:$0xff]
  %v451 = vld [vmem:[%s446 + $0x20] sm:$0xff]
  %v452 = vld [vmem:[%s446 + $0x28] sm:$0xff]
  %v453 = vld [vmem:[%s446 + $0x30] sm:$0xff]
  %v461 = vunpack.c.l.b16 %v447
  %v462 = vunpack.c.h.b16 %v447
  %v463 = vunpack.c.l.b16 %v448
  %v464 = vunpack.c.h.b16 %v448
  %v465 = vunpack.c.l.b16 %v449
  %v466 = vunpack.c.h.b16 %v449
  %v467 = vunpack.c.l.b16 %v450
  %v468 = vunpack.c.h.b16 %v450
  %v469 = vunpack.c.l.b16 %v451
  %v470 = vunpack.c.h.b16 %v451
  %v471 = vunpack.c.l.b16 %v452
  %v472 = vunpack.c.h.b16 %v452
  %v473 = vunpack.c.l.b16 %v453
  %v474 = vunpack.c.h.b16 %v453
  %v475 = vpack.c.b16 %v463, %v461
  %v476 = vpack.c.b16 %v464, %v462
  %v477 = vpack.c.b16 %v467, %v465
  %v478 = vpack.c.b16 %v468, %v466
  %v479 = vpack.c.b16 %v471, %v469
  %v480 = vpack.c.b16 %v472, %v470
  %v481 = vpack.c.b16 %v473, %v473
  %v482 = vpack.c.b16 %v474, %v474
  %v488 = vsel %vm131, %v476, 0
  %v491 = vsel %vm131, %v478, 0
  %v494 = vsel %vm131, %v480, 0
  %v497 = vsel %vm131, %v482, 0
  %499 = vmatprep.subr.bf16.mxu0 0
  %500 = vmatpush1.bf16.msra.mxu0 %v112
  %501 = vmatprep.subr.bf16.mxu0 0
  %502 = vmatpush1.bf16.msra.mxu0 %v113
  %503 = vmatprep.subr.bf16.mxu0 0
  %504 = vmatpush1.bf16.msra.mxu0 %v114
  %505 = vmatprep.subr.bf16.mxu0 0
  %506 = vmatpush1.bf16.msra.mxu0 %v115
  %507 = vmatprep.subr.bf16.mxu0 0
  %508 = vmatpush1.bf16.msra.mxu0 %v116
  %509 = vmatprep.subr.bf16.mxu0 0
  %510 = vmatpush1.bf16.msra.mxu0 %v117
  %511 = vmatprep.subr.bf16.mxu0 0
  %512 = vmatpush1.bf16.msra.mxu0 %v118
  %513 = vmatprep.subr.bf16.mxu0 0
  %514 = vmatpush1.bf16.msra.mxu0 %v119
  %515 = vmatprep.subr.bf16.mxu0 0
  %516 = vmatpush1.bf16.msra.mxu0 %v120
  %517 = vmatprep.subr.bf16.mxu0 0
  %518 = vmatpush1.bf16.msra.mxu0 %v146
  %519 = vmatprep.subr.bf16.mxu0 0
  %520 = vmatpush1.bf16.msra.mxu0 0
  %521 = vmatprep.subr.bf16.mxu0 0
  %522 = vmatpush1.bf16.msra.mxu0 0
  %523 = vmatprep.subr.bf16.mxu0 0
  %524 = vmatpush1.bf16.msra.mxu0 0
  %525 = vmatprep.subr.bf16.mxu0 0
  %526 = vmatpush1.bf16.msra.mxu0 0
  %527 = vmatprep.subr.bf16.mxu0 0
  %528 = vmatpush1.bf16.msra.mxu0 0
  %529 = vmatprep.subr.bf16.mxu0 0
  %530 = vmatpush1.bf16.msra.mxu0 0
  %531 = vmatprep.mubr.bf16.mxu0 %v488
  %532 = vmatmul.mubr.bf16.gmra.mrb[0].mxu0 %v475
  %v533 = vpop.f32.mrb[0].mxu0
  %v534 = vadd.f32 0.0, %v533
  %v535 = vpop.f32.mrb[0].mxu0
  %v536 = vpop.f32.mrb[0].mxu0
  %v537 = vadd.f32 0.0, %v536
  %v538 = vpop.f32.mrb[0].mxu0
  %539 = vmatprep.mubr.bf16.mxu0 %v491
  %540 = vmatmul.mubr.bf16.gmra.mrb[0].mxu0 %v477
  %v541 = vpop.f32.mrb[0].mxu0
  %v542 = vadd.f32 0.0, %v541
  %v543 = vpop.f32.mrb[0].mxu0
  %v544 = vpop.f32.mrb[0].mxu0
  %v545 = vadd.f32 0.0, %v544
  %v546 = vpop.f32.mrb[0].mxu0
  %547 = vmatprep.mubr.bf16.mxu0 %v494
  %548 = vmatmul.mubr.bf16.gmra.mrb[0].mxu0 %v479
  %v549 = vpop.f32.mrb[0].mxu0
  %v550 = vadd.f32 0.0, %v549
  %v551 = vpop.f32.mrb[0].mxu0
  %v552 = vpop.f32.mrb[0].mxu0
  %v553 = vadd.f32 0.0, %v552
  %v554 = vpop.f32.mrb[0].mxu0
  %555 = vmatprep.mubr.bf16.mxu0 %v497
  %556 = vmatmul.mubr.bf16.gmra.mrb[0].mxu0 %v481
  %v557 = vpop.f32.mrb[0].mxu0
  %v558 = vadd.f32 0.0, %v557
  %v559 = vpop.f32.mrb[0].mxu0
  %v560 = vpop.f32.mrb[0].mxu0
  %v561 = vpop.f32.mrb[0].mxu0
  %562 = vdwg.mxu0
  %v563 = vmax.f32 %v183, %v300
  %v564 = vmax.f32 %v186, %v303
  %v565 = vmax.f32 %v191, %v308
  %v566 = vmax.f32 %v194, %v311
  %v567 = vmax.f32 %v199, %v316
  %v568 = vmax.f32 %v202, %v319
  %v569 = vmax.f32 %v207, %v324
  %v570 = vmax.f32 %v417, %v534
  %v571 = vmax.f32 %v420, %v537
  %v572 = vmax.f32 %v425, %v542
  %v573 = vmax.f32 %v428, %v545
  %v574 = vmax.f32 %v433, %v550
  %v575 = vmax.f32 %v436, %v553
  %v576 = vmax.f32 %v441, %v558
  %v577 = vmax.f32 %v563, %v570
  %v578 = vmax.f32 %v564, %v571
  %v579 = vmax.f32 %v565, %v572
  %v580 = vmax.f32 %v566, %v573
  %v581 = vmax.f32 %v567, %v574
  %v582 = vmax.f32 %v568, %v575
  %v583 = vmax.f32 %v569, %v576
  %v584 = vld [vmem:[%s2] sm:$0x1]
  %v586 = vlaneseq
  %v587 = vshrl.u32 %v586, 7
  %v588 = vsub.s32 0, %v587
  %v589 = vrot.slane %v584, %v588
  %v591 = vadd.f32 %v577, %v589
  %v592 = vadd.f32 %v578, %v589
  %v593 = vadd.f32 %v579, %v589
  %v594 = vadd.f32 %v580, %v589
  %v595 = vadd.f32 %v581, %v589
  %v596 = vadd.f32 %v582, %v589
  %v597 = vadd.f32 %v583, %v589
  %v598 = vmax.f32 %v591, 0.0
  %v599 = vmax.f32 %v592, 0.0
  %v600 = vmax.f32 %v593, 0.0
  %v601 = vmax.f32 %v594, 0.0
  %v602 = vmax.f32 %v595, 0.0
  %v603 = vmax.f32 %v596, 0.0
  %v604 = vmax.f32 %v597, 0.0
  %v605 = vpack.c.bf16 %v599, %v598
  %v606 = vpack.c.bf16 %v601, %v600
  %v607 = vpack.c.bf16 %v603, %v602
  %v608 = vpack.c.bf16 %v604, %v604
  %v613 = vunpack.c.l.b16 %v605
  %v614 = vunpack.c.h.b16 %v605
  %v615 = vunpack.c.l.b16 %v606
  %v616 = vunpack.c.h.b16 %v606
  %v617 = vunpack.c.l.b16 %v607
  %v618 = vunpack.c.h.b16 %v607
  %v619 = vunpack.c.l.b16 %v608
  %v620 = vpack.c.b16 %v613, %v613
  %v621 = vpack.c.b16 %v614, %v614
  %v622 = vpack.c.b16 %v615, %v615
  %v623 = vpack.c.b16 %v616, %v616
  %v624 = vpack.c.b16 %v617, %v617
  %v625 = vpack.c.b16 %v618, %v618
  %v626 = vpack.c.b16 %v619, %v619
  %634 = vst [vmem:[%s3] sm:$0xf] %v620
  %635 = vst [vmem:[%s3 + $0x4] sm:$0xf] %v621
  %636 = vst [vmem:[%s3 + $0x8] sm:$0xf] %v622
  %637 = vst [vmem:[%s3 + $0xc] sm:$0xf] %v623
  %638 = vst [vmem:[%s3 + $0x10] sm:$0xf] %v624
  %639 = vst [vmem:[%s3 + $0x14] sm:$0xf] %v625
  %640 = vst [vmem:[%s3 + $0x18] sm:$0xf] %v626
  // Predicated region
  $region14: #{lenet100_forward.4} parent=0 // pred_check
    _
  $region15: #{lenet100_forward.4} parent=0 // pred_check_branch
    %642 = sbr.rel (0) target = $region17
  $region16: #{lenet100_forward.4} parent=0 // pred_region
    _
  $region17: #{lenet100_forward.4} parent=0 // pred_fallthru
    _
  // Predicated region
  $region18: #{lenet100_forward.4} parent=0 // pred_check
    _
  $region19: #{lenet100_forward.4} parent=0 // pred_check_branch
    %644 = sbr.rel (0) target = $region21
  $region20: #{lenet100_forward.4} parent=0 // pred_region
    _
  $region21: #{lenet100_forward.4} parent=0 // pred_fallthru
    _

// kernel: lenet100_forward.5
$region0: #{lenet100_forward.5}
  #allocation0 [shape = 'u32[]', space=smem, size = 0x4, offset = 0x4, fixed_abs, tag = 'smem constant byte address 0x4 - core index']
  #allocation1 [shape = 'u32[144,128]{1,0:T(1,128)}', space=vmem, size = 0x12000, scoped, tag = 'internal scratch']
  %s0 = inlined_call_operand.vmem [shape: bf16[8,400], index: 0, kind: input, shape index: {}]
  %s1 = inlined_call_operand.vmem [shape: bf16[400,128], index: 1, kind: input, shape index: {}]
  %s2 = inlined_call_operand.vmem [shape: f32[1,128], index: 2, kind: input, shape index: {}]
  %s3 = inlined_call_operand.vmem [shape: bf16[128,128], index: 3, kind: input, shape index: {}]
  %s4 = inlined_call_operand.vmem [shape: f32[1,128], index: 4, kind: input, shape index: {}]
  %s5 = inlined_call_operand.vmem [shape: bf16[128,128], index: 5, kind: input, shape index: {}]
  %s6 = inlined_call_operand.vmem [shape: f32[1,128], index: 6, kind: input, shape index: {}]
  %s7 = inlined_call_operand.vmem [shape: f32[8,128], index: 7, kind: output, shape index: {}]
  %s8 = sld [smem:[#allocation0]]
  $region38: #{lenet100_forward.5} parent=0
    _
  %s10 = ssub.s32 1, %s8
  %s11 = scalar_select 0, %s10, %s8
  // Predicated region
  $region2: #{lenet100_forward.5} parent=0 // pred_check
    _
  $region3: #{lenet100_forward.5} parent=0 // pred_check_branch
    %13 = sbr.rel (0) target = $region5
  $region4: #{lenet100_forward.5} parent=0 // pred_region
    _
  $region5: #{lenet100_forward.5} parent=0 // pred_fallthru
    _
  // Predicated region
  $region6: #{lenet100_forward.5} parent=0 // pred_check
    _
  $region7: #{lenet100_forward.5} parent=0 // pred_check_branch
    %15 = sbr.rel (0) target = $region9
  $region8: #{lenet100_forward.5} parent=0 // pred_region
    _
  $region9: #{lenet100_forward.5} parent=0 // pred_fallthru
    _
  // Predicated region
  $region10: #{lenet100_forward.5} parent=0 // pred_check
    _
  $region11: #{lenet100_forward.5} parent=0 // pred_check_branch
    %17 = sbr.rel (0) target = $region13
  $region12: #{lenet100_forward.5} parent=0 // pred_region
    _
  $region13: #{lenet100_forward.5} parent=0 // pred_fallthru
    _
  // Predicated region
  $region14: #{lenet100_forward.5} parent=0 // pred_check
    _
  $region15: #{lenet100_forward.5} parent=0 // pred_check_branch
    %19 = sbr.rel (0) target = $region17
  $region16: #{lenet100_forward.5} parent=0 // pred_region
    _
  $region17: #{lenet100_forward.5} parent=0 // pred_fallthru
    _
  // Predicated region
  $region18: #{lenet100_forward.5} parent=0 // pred_check
    _
  $region19: #{lenet100_forward.5} parent=0 // pred_check_branch
    %21 = sbr.rel (0) target = $region21
  $region20: #{lenet100_forward.5} parent=0 // pred_region
    _
  $region21: #{lenet100_forward.5} parent=0 // pred_fallthru
    _
  // Predicated region
  $region22: #{lenet100_forward.5} parent=0 // pred_check
    _
  $region23: #{lenet100_forward.5} parent=0 // pred_check_branch
    %23 = sbr.rel (0) target = $region25
  $region24: #{lenet100_forward.5} parent=0 // pred_region
    _
  $region25: #{lenet100_forward.5} parent=0 // pred_fallthru
    _
  // Predicated region
  $region26: #{lenet100_forward.5} parent=0 // pred_check
    _
  $region27: #{lenet100_forward.5} parent=0 // pred_check_branch
    %25 = sbr.rel (0) target = $region29
  $region28: #{lenet100_forward.5} parent=0 // pred_region
    _
  $region29: #{lenet100_forward.5} parent=0 // pred_fallthru
    _
  %v27 = vld [vmem:[%s0] sm:$0xff]
  %v28 = vld [vmem:[%s0 + $0x8] sm:$0xff]
  %v29 = vld [vmem:[%s1] sm:$0xf]
  %v30 = vld [vmem:[%s1 + $0x4] sm:$0xf]
  %v31 = vld [vmem:[%s1 + $0x8] sm:$0xf]
  %v32 = vld [vmem:[%s1 + $0xc] sm:$0xf]
  %v33 = vld [vmem:[%s1 + $0x10] sm:$0xf]
  %v34 = vld [vmem:[%s1 + $0x14] sm:$0xf]
  %v35 = vld [vmem:[%s1 + $0x18] sm:$0xf]
  %v36 = vld [vmem:[%s1 + $0x1c] sm:$0xf]
  %v37 = vld [vmem:[%s1 + $0x20] sm:$0xf]
  %v38 = vld [vmem:[%s1 + $0x24] sm:$0xf]
  %v39 = vld [vmem:[%s1 + $0x28] sm:$0xf]
  %v40 = vld [vmem:[%s1 + $0x2c] sm:$0xf]
  %v41 = vld [vmem:[%s1 + $0x30] sm:$0xf]
  %v42 = vld [vmem:[%s1 + $0x34] sm:$0xf]
  %v43 = vld [vmem:[%s1 + $0x38] sm:$0xf]
  %v44 = vld [vmem:[%s1 + $0x3c] sm:$0xf]
  %v45 = vld [vmem:[%s1 + $0x40] sm:$0xf]
  %v46 = vld [vmem:[%s1 + $0x44] sm:$0xf]
  %v47 = vld [vmem:[%s1 + $0x48] sm:$0xf]
  %v48 = vld [vmem:[%s1 + $0x4c] sm:$0xf]
  %v49 = vld [vmem:[%s1 + $0x50] sm:$0xf]
  %v50 = vld [vmem:[%s1 + $0x54] sm:$0xf]
  %v51 = vld [vmem:[%s1 + $0x58] sm:$0xf]
  %v52 = vld [vmem:[%s1 + $0x5c] sm:$0xf]
  %v53 = vld [vmem:[%s1 + $0x60] sm:$0xf]
  %v54 = vld [vmem:[%s1 + $0x64] sm:$0xf]
  %v55 = vld [vmem:[%s1 + $0x68] sm:$0xf]
  %v56 = vld [vmem:[%s1 + $0x6c] sm:$0xf]
  %v57 = vld [vmem:[%s1 + $0x70] sm:$0xf]
  %v58 = vld [vmem:[%s1 + $0x74] sm:$0xf]
  %v59 = vld [vmem:[%s1 + $0x78] sm:$0xf]
  %v60 = vld [vmem:[%s1 + $0x7c] sm:$0xf]
  %v61 = vld [vmem:[%s1 + $0x80] sm:$0xf]
  %v62 = vld [vmem:[%s1 + $0x84] sm:$0xf]
  %v63 = vld [vmem:[%s1 + $0x88] sm:$0xf]
  %v64 = vld [vmem:[%s1 + $0x8c] sm:$0xf]
  %v65 = vld [vmem:[%s1 + $0x90] sm:$0xf]
  %v66 = vld [vmem:[%s1 + $0x94] sm:$0xf]
  %v67 = vld [vmem:[%s1 + $0x98] sm:$0xf]
  %v68 = vld [vmem:[%s1 + $0x9c] sm:$0xf]
  %v69 = vld [vmem:[%s1 + $0xa0] sm:$0xf]
  %v70 = vld [vmem:[%s1 + $0xa4] sm:$0xf]
  %v71 = vld [vmem:[%s1 + $0xa8] sm:$0xf]
  %v72 = vld [vmem:[%s1 + $0xac] sm:$0xf]
  %v73 = vld [vmem:[%s1 + $0xb0] sm:$0xf]
  %v74 = vld [vmem:[%s1 + $0xb4] sm:$0xf]
  %v75 = vld [vmem:[%s1 + $0xb8] sm:$0xf]
  %v76 = vld [vmem:[%s1 + $0xbc] sm:$0xf]
  %v77 = vld [vmem:[%s1 + $0xc0] sm:$0xf]
  %v78 = vld [vmem:[%s1 + $0xc4] sm:$0xf]
  %v79 = vld [vmem:[%s2] sm:$0x1]
  %v81 = vlaneseq
  %v82 = vshrl.u32 %v81, 7
  %v83 = vsub.s32 0, %v82
  %v84 = vrot.slane %v79, %v83
  %v88 = vunpack.c.l.b16 %v27
  %v89 = vunpack.c.h.b16 %v27
  %v90 = vunpack.c.l.b16 %v28
  %v91 = vunpack.c.h.b16 %v28
  %v92 = vpack.c.b16 %v88, %v88
  %v93 = vpack.c.b16 %v89, %v89
  %v94 = vpack.c.b16 %v90, %v90
  %v95 = vpack.c.b16 %v91, %v91
  %v149 = vunpack.c.l.b16 %v29
  %v150 = vunpack.c.l.b16 %v30
  %v151 = vunpack.c.l.b16 %v31
  %v152 = vunpack.c.l.b16 %v32
  %v153 = vunpack.c.l.b16 %v33
  %v154 = vunpack.c.l.b16 %v34
  %v155 = vunpack.c.l.b16 %v35
  %v156 = vunpack.c.l.b16 %v36
  %v157 = vunpack.c.l.b16 %v37
  %v158 = vunpack.c.l.b16 %v38
  %v159 = vunpack.c.l.b16 %v39
  %v160 = vunpack.c.l.b16 %v40
  %v161 = vunpack.c.l.b16 %v41
  %v162 = vunpack.c.l.b16 %v42
  %v163 = vunpack.c.l.b16 %v43
  %v164 = vunpack.c.l.b16 %v44
  %v165 = vunpack.c.l.b16 %v45
  %v166 = vunpack.c.l.b16 %v46
  %v167 = vunpack.c.l.b16 %v47
  %v168 = vunpack.c.l.b16 %v48
  %v169 = vunpack.c.l.b16 %v49
  %v170 = vunpack.c.l.b16 %v50
  %v171 = vunpack.c.l.b16 %v51
  %v172 = vunpack.c.l.b16 %v52
  %v173 = vunpack.c.l.b16 %v53
  %v174 = vunpack.c.l.b16 %v54
  %v175 = vunpack.c.l.b16 %v55
  %v176 = vunpack.c.l.b16 %v56
  %v177 = vunpack.c.l.b16 %v57
  %v178 = vunpack.c.l.b16 %v58
  %v179 = vunpack.c.l.b16 %v59
  %v180 = vunpack.c.l.b16 %v60
  %v181 = vunpack.c.l.b16 %v61
  %v182 = vunpack.c.l.b16 %v62
  %v183 = vunpack.c.l.b16 %v63
  %v184 = vunpack.c.l.b16 %v64
  %v185 = vunpack.c.l.b16 %v65
  %v186 = vunpack.c.l.b16 %v66
  %v187 = vunpack.c.l.b16 %v67
  %v188 = vunpack.c.l.b16 %v68
  %v189 = vunpack.c.l.b16 %v69
  %v190 = vunpack.c.l.b16 %v70
  %v191 = vunpack.c.l.b16 %v71
  %v192 = vunpack.c.l.b16 %v72
  %v193 = vunpack.c.l.b16 %v73
  %v194 = vunpack.c.l.b16 %v74
  %v195 = vunpack.c.l.b16 %v75
  %v196 = vunpack.c.l.b16 %v76
  %v197 = vunpack.c.l.b16 %v77
  %v198 = vunpack.c.l.b16 %v78
  %v199 = vpack.c.b16 %v150, %v149
  %v200 = vpack.c.b16 %v152, %v151
  %v201 = vpack.c.b16 %v154, %v153
  %v202 = vpack.c.b16 %v156, %v155
  %v203 = vpack.c.b16 %v158, %v157
  %v204 = vpack.c.b16 %v160, %v159
  %v205 = vpack.c.b16 %v162, %v161
  %v206 = vpack.c.b16 %v164, %v163
  %v207 = vpack.c.b16 %v166, %v165
  %v208 = vpack.c.b16 %v168, %v167
  %v209 = vpack.c.b16 %v170, %v169
  %v210 = vpack.c.b16 %v172, %v171
  %v211 = vpack.c.b16 %v174, %v173
  %v212 = vpack.c.b16 %v176, %v175
  %v213 = vpack.c.b16 %v178, %v177
  %v214 = vpack.c.b16 %v180, %v179
  %v215 = vpack.c.b16 %v182, %v181
  %v216 = vpack.c.b16 %v184, %v183
  %v217 = vpack.c.b16 %v186, %v185
  %v218 = vpack.c.b16 %v188, %v187
  %v219 = vpack.c.b16 %v190, %v189
  %v220 = vpack.c.b16 %v192, %v191
  %v221 = vpack.c.b16 %v194, %v193
  %v222 = vpack.c.b16 %v196, %v195
  %v223 = vpack.c.b16 %v198, %v197
  %vm249 = vcmask 130048
  %v251 = vsel %vm249, %v95, 0
  %253 = vmatprep.subr.bf16.mxu0 0
  %254 = vmatpush1.bf16.msra.mxu0 %v199
  %255 = vmatprep.subr.bf16.mxu0 0
  %256 = vmatpush1.bf16.msra.mxu0 %v200
  %257 = vmatprep.subr.bf16.mxu0 0
  %258 = vmatpush1.bf16.msra.mxu0 %v201
  %259 = vmatprep.subr.bf16.mxu0 0
  %260 = vmatpush1.bf16.msra.mxu0 %v202
  %261 = vmatprep.subr.bf16.mxu0 0
  %262 = vmatpush1.bf16.msra.mxu0 %v203
  %263 = vmatprep.subr.bf16.mxu0 0
  %264 = vmatpush1.bf16.msra.mxu0 %v204
  %265 = vmatprep.subr.bf16.mxu0 0
  %266 = vmatpush1.bf16.msra.mxu0 %v205
  %267 = vmatprep.subr.bf16.mxu0 0
  %268 = vmatpush1.bf16.msra.mxu0 %v206
  %269 = vmatprep.subr.bf16.mxu0 0
  %270 = vmatpush1.bf16.msra.mxu0 %v207
  %271 = vmatprep.subr.bf16.mxu0 0
  %272 = vmatpush1.bf16.msra.mxu0 %v208
  %273 = vmatprep.subr.bf16.mxu0 0
  %274 = vmatpush1.bf16.msra.mxu0 %v209
  %275 = vmatprep.subr.bf16.mxu0 0
  %276 = vmatpush1.bf16.msra.mxu0 %v210
  %277 = vmatprep.subr.bf16.mxu0 0
  %278 = vmatpush1.bf16.msra.mxu0 %v211
  %279 = vmatprep.subr.bf16.mxu0 0
  %280 = vmatpush1.bf16.msra.mxu0 %v212
  %281 = vmatprep.subr.bf16.mxu0 0
  %282 = vmatpush1.bf16.msra.mxu0 %v213
  %283 = vmatprep.subr.bf16.mxu0 0
  %284 = vmatpush1.bf16.msra.mxu0 %v214
  %285 = vmatprep.mubr.bf16.mxu0 %v93
  %286 = vmatmul.mubr.bf16.gmra.mrb[0].mxu0 %v92
  %v287 = vpop.f32.mrb[0].mxu0
  %v288 = vadd.f32 %v84, %v287
  %v289 = vpop.f32.mrb[0].mxu0
  %v290 = vpop.f32.mrb[0].mxu0
  %v291 = vpop.f32.mrb[0].mxu0
  %292 = vdwg.mxu0
  %293 = vmatprep.subr.bf16.mxu0 0
  %294 = vmatpush1.bf16.msra.mxu0 %v215
  %295 = vmatprep.subr.bf16.mxu0 0
  %296 = vmatpush1.bf16.msra.mxu0 %v216
  %297 = vmatprep.subr.bf16.mxu0 0
  %298 = vmatpush1.bf16.msra.mxu0 %v217
  %299 = vmatprep.subr.bf16.mxu0 0
  %300 = vmatpush1.bf16.msra.mxu0 %v218
  %301 = vmatprep.subr.bf16.mxu0 0
  %302 = vmatpush1.bf16.msra.mxu0 %v219
  %303 = vmatprep.subr.bf16.mxu0 0
  %304 = vmatpush1.bf16.msra.mxu0 %v220
  %305 = vmatprep.subr.bf16.mxu0 0
  %306 = vmatpush1.bf16.msra.mxu0 %v221
  %307 = vmatprep.subr.bf16.mxu0 0
  %308 = vmatpush1.bf16.msra.mxu0 %v222
  %309 = vmatprep.subr.bf16.mxu0 0
  %310 = vmatpush1.bf16.msra.mxu0 %v223
  %311 = vmatprep.subr.bf16.mxu0 0
  %312 = vmatpush1.bf16.msra.mxu0 0
  %313 = vmatprep.subr.bf16.mxu0 0
  %314 = vmatpush1.bf16.msra.mxu0 0
  %315 = vmatprep.subr.bf16.mxu0 0
  %316 = vmatpush1.bf16.msra.mxu0 0
  %317 = vmatprep.subr.bf16.mxu0 0
  %318 = vmatpush1.bf16.msra.mxu0 0
  %319 = vmatprep.subr.bf16.mxu0 0
  %320 = vmatpush1.bf16.msra.mxu0 0
  %321 = vmatprep.subr.bf16.mxu0 0
  %322 = vmatpush1.bf16.msra.mxu0 0
  %323 = vmatprep.subr.bf16.mxu0 0
  %324 = vmatpush1.bf16.msra.mxu0 0
  %325 = vmatprep.mubr.bf16.mxu0 %v251
  %326 = vmatmul.mubr.bf16.gmra.mrb[0].mxu0 %v94
  %v327 = vpop.f32.mrb[0].mxu0
  %v328 = vadd.f32 %v288, %v327
  %v329 = vpop.f32.mrb[0].mxu0
  %v330 = vpop.f32.mrb[0].mxu0
  %v331 = vpop.f32.mrb[0].mxu0
  %332 = vdwg.mxu0
  %v333 = vmax.f32 %v328, 0.0
  %v334 = vpack.c.bf16 %v333, %v333
  %v335 = vld [vmem:[%s3] sm:$0xf]
  %v336 = vld [vmem:[%s3 + $0x4] sm:$0xf]
  %v337 = vld [vmem:[%s3 + $0x8] sm:$0xf]
  %v338 = vld [vmem:[%s3 + $0xc] sm:$0xf]
  %v339 = vld [vmem:[%s3 + $0x10] sm:$0xf]
  %v340 = vld [vmem:[%s3 + $0x14] sm:$0xf]
  %v341 = vld [vmem:[%s3 + $0x18] sm:$0xf]
  %v342 = vld [vmem:[%s3 + $0x1c] sm:$0xf]
  %v343 = vld [vmem:[%s3 + $0x20] sm:$0xf]
  %v344 = vld [vmem:[%s3 + $0x24] sm:$0xf]
  %v345 = vld [vmem:[%s3 + $0x28] sm:$0xf]
  %v346 = vld [vmem:[%s3 + $0x2c] sm:$0xf]
  %v347 = vld [vmem:[%s3 + $0x30] sm:$0xf]
  %v348 = vld [vmem:[%s3 + $0x34] sm:$0xf]
  %v349 = vld [vmem:[%s3 + $0x38] sm:$0xf]
  %v350 = vld [vmem:[%s3 + $0x3c] sm:$0xf]
  %v351 = vld [vmem:[%s4] sm:$0x1]
  %v353 = vlaneseq
  %v354 = vshrl.u32 %v353, 7
  %v355 = vsub.s32 0, %v354
  %v356 = vrot.slane %v351, %v355
  %v374 = vunpack.c.l.b16 %v335
  %v375 = vunpack.c.l.b16 %v336
  %v376 = vunpack.c.l.b16 %v337
  %v377 = vunpack.c.l.b16 %v338
  %v378 = vunpack.c.l.b16 %v339
  %v379 = vunpack.c.l.b16 %v340
  %v380 = vunpack.c.l.b16 %v341
  %v381 = vunpack.c.l.b16 %v342
  %v382 = vunpack.c.l.b16 %v343
  %v383 = vunpack.c.l.b16 %v344
  %v384 = vunpack.c.l.b16 %v345
  %v385 = vunpack.c.l.b16 %v346
  %v386 = vunpack.c.l.b16 %v347
  %v387 = vunpack.c.l.b16 %v348
  %v388 = vunpack.c.l.b16 %v349
  %v389 = vunpack.c.l.b16 %v350
  %v390 = vpack.c.b16 %v375, %v374
  %v391 = vpack.c.b16 %v377, %v376
  %v392 = vpack.c.b16 %v379, %v378
  %v393 = vpack.c.b16 %v381, %v380
  %v394 = vpack.c.b16 %v383, %v382
  %v395 = vpack.c.b16 %v385, %v384
  %v396 = vpack.c.b16 %v387, %v386
  %v397 = vpack.c.b16 %v389, %v388
  %406 = vmatprep.subr.bf16.mxu0 0
  %407 = vmatpush1.bf16.msra.mxu0 %v390
  %408 = vmatprep.subr.bf16.mxu0 0
  %409 = vmatpush1.bf16.msra.mxu0 %v391
  %410 = vmatprep.subr.bf16.mxu0 0
  %411 = vmatpush1.bf16.msra.mxu0 %v392
  %412 = vmatprep.subr.bf16.mxu0 0
  %413 = vmatpush1.bf16.msra.mxu0 %v393
  %414 = vmatprep.subr.bf16.mxu0 0
  %415 = vmatpush1.bf16.msra.mxu0 %v394
  %416 = vmatprep.subr.bf16.mxu0 0
  %417 = vmatpush1.bf16.msra.mxu0 %v395
  %418 = vmatprep.subr.bf16.mxu0 0
  %419 = vmatpush1.bf16.msra.mxu0 %v396
  %420 = vmatprep.subr.bf16.mxu0 0
  %421 = vmatpush1.bf16.msra.mxu0 %v397
  %422 = vmatprep.subr.bf16.mxu0 0
  %423 = vmatpush1.bf16.msra.mxu0 0
  %424 = vmatprep.subr.bf16.mxu0 0
  %425 = vmatpush1.bf16.msra.mxu0 0
  %426 = vmatprep.subr.bf16.mxu0 0
  %427 = vmatpush1.bf16.msra.mxu0 0
  %428 = vmatprep.subr.bf16.mxu0 0
  %429 = vmatpush1.bf16.msra.mxu0 0
  %430 = vmatprep.subr.bf16.mxu0 0
  %431 = vmatpush1.bf16.msra.mxu0 0
  %432 = vmatprep.subr.bf16.mxu0 0
  %433 = vmatpush1.bf16.msra.mxu0 0
  %434 = vmatprep.subr.bf16.mxu0 0
  %435 = vmatpush1.bf16.msra.mxu0 0
  %436 = vmatprep.subr.bf16.mxu0 0
  %437 = vmatpush1.bf16.msra.mxu0 0
  %438 = vmatprep.mubr.bf16.mxu0 0
  %439 = vmatmul.mubr.bf16.gmra.mrb[0].mxu0 %v334
  %v440 = vpop.f32.mrb[0].mxu0
  %v441 = vadd.f32 %v356, %v440
  %v442 = vpop.f32.mrb[0].mxu0
  %v443 = vpop.f32.mrb[0].mxu0
  %v444 = vpop.f32.mrb[0].mxu0
  %445 = vdwg.mxu0
  %v446 = vmax.f32 %v441, 0.0
  %v447 = vpack.c.bf16 %v446, %v446
  %v448 = vld [vmem:[%s5] sm:$0xf]
  %v449 = vld [vmem:[%s5 + $0x4] sm:$0xf]
  %v450 = vld [vmem:[%s5 + $0x8] sm:$0xf]
  %v451 = vld [vmem:[%s5 + $0xc] sm:$0xf]
  %v452 = vld [vmem:[%s5 + $0x10] sm:$0xf]
  %v453 = vld [vmem:[%s5 + $0x14] sm:$0xf]
  %v454 = vld [vmem:[%s5 + $0x18] sm:$0xf]
  %v455 = vld [vmem:[%s5 + $0x1c] sm:$0xf]
  %v456 = vld [vmem:[%s5 + $0x20] sm:$0xf]
  %v457 = vld [vmem:[%s5 + $0x24] sm:$0xf]
  %v458 = vld [vmem:[%s5 + $0x28] sm:$0xf]
  %v459 = vld [vmem:[%s5 + $0x2c] sm:$0xf]
  %v460 = vld [vmem:[%s5 + $0x30] sm:$0xf]
  %v461 = vld [vmem:[%s5 + $0x34] sm:$0xf]
  %v462 = vld [vmem:[%s5 + $0x38] sm:$0xf]
  %v463 = vld [vmem:[%s5 + $0x3c] sm:$0xf]
  %v464 = vld [vmem:[%s6] sm:$0x1]
  %v466 = vlaneseq
  %v467 = vshrl.u32 %v466, 7
  %v468 = vsub.s32 0, %v467
  %v469 = vrot.slane %v464, %v468
  %v487 = vunpack.c.l.b16 %v448
  %v488 = vunpack.c.l.b16 %v449
  %v489 = vunpack.c.l.b16 %v450
  %v490 = vunpack.c.l.b16 %v451
  %v491 = vunpack.c.l.b16 %v452
  %v492 = vunpack.c.l.b16 %v453
  %v493 = vunpack.c.l.b16 %v454
  %v494 = vunpack.c.l.b16 %v455
  %v495 = vunpack.c.l.b16 %v456
  %v496 = vunpack.c.l.b16 %v457
  %v497 = vunpack.c.l.b16 %v458
  %v498 = vunpack.c.l.b16 %v459
  %v499 = vunpack.c.l.b16 %v460
  %v500 = vunpack.c.l.b16 %v461
  %v501 = vunpack.c.l.b16 %v462
  %v502 = vunpack.c.l.b16 %v463
  %v503 = vpack.c.b16 %v488, %v487
  %v504 = vpack.c.b16 %v490, %v489
  %v505 = vpack.c.b16 %v492, %v491
  %v506 = vpack.c.b16 %v494, %v493
  %v507 = vpack.c.b16 %v496, %v495
  %v508 = vpack.c.b16 %v498, %v497
  %v509 = vpack.c.b16 %v500, %v499
  %v510 = vpack.c.b16 %v502, %v501
  %519 = vmatprep.subr.bf16.mxu0 0
  %520 = vmatpush1.bf16.msra.mxu0 %v503
  %521 = vmatprep.subr.bf16.mxu0 0
  %522 = vmatpush1.bf16.msra.mxu0 %v504
  %523 = vmatprep.subr.bf16.mxu0 0
  %524 = vmatpush1.bf16.msra.mxu0 %v505
  %525 = vmatprep.subr.bf16.mxu0 0
  %526 = vmatpush1.bf16.msra.mxu0 %v506
  %527 = vmatprep.subr.bf16.mxu0 0
  %528 = vmatpush1.bf16.msra.mxu0 %v507
  %529 = vmatprep.subr.bf16.mxu0 0
  %530 = vmatpush1.bf16.msra.mxu0 %v508
  %531 = vmatprep.subr.bf16.mxu0 0
  %532 = vmatpush1.bf16.msra.mxu0 %v509
  %533 = vmatprep.subr.bf16.mxu0 0
  %534 = vmatpush1.bf16.msra.mxu0 %v510
  %535 = vmatprep.subr.bf16.mxu0 0
  %536 = vmatpush1.bf16.msra.mxu0 0
  %537 = vmatprep.subr.bf16.mxu0 0
  %538 = vmatpush1.bf16.msra.mxu0 0
  %539 = vmatprep.subr.bf16.mxu0 0
  %540 = vmatpush1.bf16.msra.mxu0 0
  %541 = vmatprep.subr.bf16.mxu0 0
  %542 = vmatpush1.bf16.msra.mxu0 0
  %543 = vmatprep.subr.bf16.mxu0 0
  %544 = vmatpush1.bf16.msra.mxu0 0
  %545 = vmatprep.subr.bf16.mxu0 0
  %546 = vmatpush1.bf16.msra.mxu0 0
  %547 = vmatprep.subr.bf16.mxu0 0
  %548 = vmatpush1.bf16.msra.mxu0 0
  %549 = vmatprep.subr.bf16.mxu0 0
  %550 = vmatpush1.bf16.msra.mxu0 0
  %551 = vmatprep.mubr.bf16.mxu0 0
  %552 = vmatmul.mubr.bf16.gmra.mrb[0].mxu0 %v447
  %v553 = vpop.f32.mrb[0].mxu0
  %v554 = vadd.f32 %v469, %v553
  %v555 = vpop.f32.mrb[0].mxu0
  %v556 = vpop.f32.mrb[0].mxu0
  %v557 = vpop.f32.mrb[0].mxu0
  %558 = vdwg.mxu0
  %v559 = vlaneseq
  %v560 = vand.u32 %v559, 127
  %vm561 = vcmp.lt.s32.totalorder %v560, 100
  %v562 = vsel %vm561, %v554, -1e+30
  %563 = vmax.xlane.f32.xlu0 %v562
  %v564 = vpop.xlane.xlu0 %563
  %v565 = vsub.f32 %v562, %v564
  %v566 = vmul.f32 %v565, 1.442695
  %v567 = vpow.pop %v566
  %568 = vadd.xlane.f32.xlu0 %v567
  %v569 = vpop.xlane.xlu0 %568
  %v570 = vrcp.pop %v569
  %v571 = vmul.f32 %v567, %v570
  %572 = vst [vmem:[%s7] sm:$0xff] %v571
  // Predicated region
  $region30: #{lenet100_forward.5} parent=0 // pred_check
    _
  $region31: #{lenet100_forward.5} parent=0 // pred_check_branch
    %574 = sbr.rel (0) target = $region33
  $region32: #{lenet100_forward.5} parent=0 // pred_region
    _
  $region33: #{lenet100_forward.5} parent=0 // pred_fallthru
    _
  // Predicated region
  $region34: #{lenet100_forward.5} parent=0 // pred_check
    _
  $region35: #{lenet100_forward.5} parent=0 // pred_check_branch
    %576 = sbr.rel (0) target = $region37
  $region36: #{lenet100_forward.5} parent=0 // pred_region
    _
  $region37: #{lenet100_forward.5} parent=0 // pred_fallthru
    _

</llo_original>
